<compile_context>
chip_gen: v5e
topology: v5e:2x2
jax: 0.10.0
libtpu: 0.0.40
codegen_flags: <defaults>
</compile_context>

<pallas_src>
import functools

import numpy as np
import jax
import jax.numpy as jnp
from jax.experimental import pallas as pl
from jax.experimental.pallas import tpu as pltpu


# ----------------------------------------------------------------------------
# Kernel: one (batch_block, layer) grid step.
# ----------------------------------------------------------------------------
def _transformer_kernel(x_ref,
                        ln1w_ref, ln1b_ref, wqkv_ref, bqkv_ref, wo_ref, bo_ref,
                        ln2w_ref, ln2b_ref, wfc_ref, bfc_ref, wproj_ref, bproj_ref,
                        out_ref,
                        *, n_head, tb, l_valid, l_pad, mlp_chunk):
    layer = pl.program_id(1)

    D = x_ref.shape[-1]
    M = tb * l_pad
    hd = D // n_head
    B = tb * n_head

    # First layer for this batch block: load activations into the resident
    # fp32 output block (acts as the cross-layer accumulator; no extra scratch).
    @pl.when(layer == 0)
    def _():
        out_ref[0] = x_ref[0]

    def layer_norm(v, w_ref, b_ref):
        # fp32 LayerNorm (matches the fp16-safe LayerNorm subclass).
        mu = jnp.mean(v, axis=-1, keepdims=True)
        var = jnp.mean((v - mu) ** 2, axis=-1, keepdims=True)
        return (v - mu) * jax.lax.rsqrt(var + 1e-5) * w_ref[0] + b_ref[0]

    x = out_ref[0]                                            # (M, D) fp32

    # ---- attention branch: x + out_proj(MHSA(LN1(x))) -----------------------
    h = layer_norm(x, ln1w_ref, ln1b_ref).astype(jnp.bfloat16)
    qkv = jnp.dot(h, wqkv_ref[0],
                  preferred_element_type=jnp.float32) + bqkv_ref[0]   # (M, 3D)
    # Note: 1/sqrt(head_dim) is already folded into the Q weights/bias.

    def heads(a):
        # (M, D) -> (tb*n_head, l_pad, hd); one relayout per tensor per layer.
        a = a.reshape(tb, l_pad, n_head, hd)
        a = jnp.transpose(a, (0, 2, 1, 3))
        return a.reshape(B, l_pad, hd).astype(jnp.bfloat16)

    qh = heads(qkv[:, 0 * D:1 * D])
    kh = heads(qkv[:, 1 * D:2 * D])
    vh = heads(qkv[:, 2 * D:3 * D])

    s = jnp.einsum('bqd,bkd->bqk', qh, kh,
                   preferred_element_type=jnp.float32)        # (B, L, L) fp32
    if l_pad != l_valid:
        # Single mask per layer (hoisted out of any head/batch loop).
        cols = jax.lax.broadcasted_iota(jnp.int32, s.shape, 2)
        s = jnp.where(cols < l_valid, s, jnp.float32(-1e30))
    s = s - jnp.max(s, axis=-1, keepdims=True)
    p = jnp.exp(s)
    inv = pl.reciprocal(jnp.sum(p, axis=-1, keepdims=True), approx=True)
    ctx = jnp.einsum('bqk,bkd->bqd', p.astype(jnp.bfloat16), vh,
                     preferred_element_type=jnp.float32)      # (B, L, hd) fp32
    ctx = ctx * inv                                           # deferred softmax norm
    ctx = ctx.reshape(tb, n_head, l_pad, hd)
    ctx = jnp.transpose(ctx, (0, 2, 1, 3)).reshape(M, D).astype(jnp.bfloat16)

    attn = jnp.dot(ctx, wo_ref[0],
                   preferred_element_type=jnp.float32) + bo_ref[0]
    x = x + attn

    # ---- MLP branch: x + c_proj(QuickGELU(c_fc(LN2(x)))), hidden chunked ----
    h = layer_norm(x, ln2w_ref, ln2b_ref).astype(jnp.bfloat16)
    hidden = 4 * D
    acc = x + bproj_ref[0]
    for c0 in range(0, hidden, mlp_chunk):                    # static chunk loop
        c1 = c0 + mlp_chunk
        h1 = jnp.dot(h, wfc_ref[0, :, c0:c1],
                     preferred_element_type=jnp.float32) + bfc_ref[0, :, c0:c1]
        h1 = h1 * jax.nn.sigmoid(1.702 * h1)                  # QuickGELU (fp32)
        acc = acc + jnp.dot(h1.astype(jnp.bfloat16), wproj_ref[0, c0:c1, :],
                            preferred_element_type=jnp.float32)
    out_ref[0] = acc


# ----------------------------------------------------------------------------
# Wrapper helpers.
# ----------------------------------------------------------------------------
def _round_up(v, m):
    return ((v + m - 1) // m) * m


def _pick_seq_pad(L):
    # Lane-dense (L, L) score tiles when L fits a single 128-lane tile.
    if 64 < L <= 128:
        return 128
    return _round_up(L, 8)


def _pick_mlp_chunk(hidden):
    if hidden <= 1024:
        return hidden
    for c in (1024, 768, 512, 384, 256, 128):
        if hidden % c == 0:
            return c
    return hidden


def _tpu_budget():
    cap = 64 * 1024 * 1024
    try:
        info = pltpu.get_tpu_info()
        cap = int(getattr(info, "vmem_capacity_bytes", cap))
    except Exception:
        pass
    vmem_limit = min(int(cap * 0.8), 112 * 1024 * 1024)   # headroom for compiler
    max_rows = 512 if cap >= 128 * 1024 * 1024 else 256    # smaller M on v7x
    return vmem_limit, max_rows


def _pick_batch_block(n, l_pad, max_rows):
    tb = max(1, min(n, max(1, max_rows // l_pad)))
    # Prefer >= 2 batch blocks so the "parallel" batch axis can use both cores.
    if tb == n and n > 1:
        tb = (n + 1) // 2
    n_pad = (-n) % tb
    return tb, n_pad


# ----------------------------------------------------------------------------
# Wrapper: single pallas_call over (batch_blocks, layers).
# ----------------------------------------------------------------------------
def transformer_forward(x_lnd, layer_params, n_head):
    """x_lnd: (L, N, D) seq-first, as in the PyTorch module. Returns (L, N, D)."""
    L, N, D = x_lnd.shape
    n_layers = len(layer_params)
    orig_dtype = x_lnd.dtype

    x = jnp.transpose(x_lnd, (1, 0, 2)).astype(jnp.float32)   # (N, L, D) fp32

    l_pad = _pick_seq_pad(L)
    if l_pad != L:
        x = jnp.pad(x, ((0, 0), (0, l_pad - L), (0, 0)))

    vmem_limit, max_rows = _tpu_budget()
    tb, n_pad = _pick_batch_block(N, l_pad, max_rows)
    if n_pad:
        x = jnp.pad(x, ((0, n_pad), (0, 0), (0, 0)))
    n_total = N + n_pad
    nb = n_total // tb
    M = tb * l_pad
    x = x.reshape(nb, M, D)

    # Stack per-layer params with a leading layer dim.  Fold 1/sqrt(head_dim)
    # into the Q third of the QKV weights/bias (one-time host-side transform).
    # Matmul weights -> bf16 (fp32 MXU accumulation in kernel); LN/biases fp32.
    scale = 1.0 / np.sqrt(D // n_head)
    matrix_idx = {2, 4, 8, 10}                                # wqkv, wo, wfc, wproj
    stacked = []
    for idx in range(12):
        parts = []
        for lp in layer_params:
            p = lp[idx]
            if idx == 2:                                      # wqkv (D, 3D)
                p = p.at[:, :D].multiply(scale)
            elif idx == 3:                                    # bqkv (1, 3D)
                p = p.at[:, :D].multiply(scale)
            parts.append(p)
        st = jnp.stack(parts, axis=0)
        if idx in matrix_idx:
            st = st.astype(jnp.bfloat16)
        stacked.append(st)

    x_spec = pl.BlockSpec((1, M, D), lambda n, l: (n, 0, 0))
    param_specs = [
        pl.BlockSpec((1,) + tuple(p.shape[1:]), lambda n, l: (l, 0, 0))
        for p in stacked
    ]
    out_spec = pl.BlockSpec((1, M, D), lambda n, l: (n, 0, 0))

    kernel = functools.partial(
        _transformer_kernel, n_head=n_head, tb=tb, l_valid=L, l_pad=l_pad,
        mlp_chunk=_pick_mlp_chunk(4 * D))

    out = pl.pallas_call(
        kernel,
        out_shape=jax.ShapeDtypeStruct((nb, M, D), jnp.float32),
        grid_spec=pltpu.PrefetchScalarGridSpec(
            num_scalar_prefetch=0,
            grid=(nb, n_layers),
            in_specs=[x_spec] + param_specs,
            out_specs=out_spec,
        ),
        compiler_params=pltpu.CompilerParams(
            dimension_semantics=("parallel", "arbitrary"),
            vmem_limit_bytes=vmem_limit,
        ),
    )(x, *stacked)

    out = out.reshape(n_total, l_pad, D)[:N, :L, :]
    return jnp.transpose(out, (1, 0, 2)).astype(orig_dtype)   # (L, N, D)


# ----------------------------------------------------------------------------
# Pure-JAX fp32 reference (same math) for a correctness check.
# ----------------------------------------------------------------------------
def _reference_forward(x_lnd, layer_params, n_head):
    x = jnp.transpose(x_lnd, (1, 0, 2)).astype(jnp.float32)   # (N, L, D)
    N, L, D = x.shape
    hd = D // n_head
    scale = 1.0 / np.sqrt(hd)

    def ln(v, w, b):
        mu = jnp.mean(v, axis=-1, keepdims=True)
        var = jnp.mean((v - mu) ** 2, axis=-1, keepdims=True)
        return (v - mu) / jnp.sqrt(var + 1e-5) * w[0] + b[0]

    for (ln1w, ln1b, wqkv, bqkv, wo, bo, ln2w, ln2b,
         wfc, bfc, wproj, bproj) in layer_params:
        h = ln(x, ln1w, ln1b)
        qkv = h @ wqkv + bqkv[0]
        q, k, v = qkv[..., :D], qkv[..., D:2 * D], qkv[..., 2 * D:]
        q = q.reshape(N, L, n_head, hd).transpose(0, 2, 1, 3) * scale
        k = k.reshape(N, L, n_head, hd).transpose(0, 2, 1, 3)
        v = v.reshape(N, L, n_head, hd).transpose(0, 2, 1, 3)
        s = jnp.einsum("nhqd,nhkd->nhqk", q, k)
        p = jax.nn.softmax(s, axis=-1)
        ctx = jnp.einsum("nhqk,nhkd->nhqd", p, v)
        ctx = ctx.transpose(0, 2, 1, 3).reshape(N, L, D)
        x = x + (ctx @ wo + bo[0])
        h = ln(x, ln2w, ln2b)
        h1 = h @ wfc + bfc[0]
        h1 = h1 * jax.nn.sigmoid(1.702 * h1)
        x = x + (h1 @ wproj + bproj[0])
    return jnp.transpose(x, (1, 0, 2))


# ----------------------------------------------------------------------------
# Deterministic parameter construction.
# ----------------------------------------------------------------------------
def init_params(key, width, layers):
    D = width
    layer_params = []
    for li in range(layers):
        ks = jax.random.split(jax.random.fold_in(key, li), 4)
        s = 0.02
        ln1w = jnp.ones((1, D), jnp.float32)
        ln1b = jnp.zeros((1, D), jnp.float32)
        wqkv = s * jax.random.normal(ks[0], (D, 3 * D), jnp.float32)
        bqkv = jnp.zeros((1, 3 * D), jnp.float32)
        wo = s * jax.random.normal(ks[1], (D, D), jnp.float32)
        bo = jnp.zeros((1, D), jnp.float32)
        ln2w = jnp.ones((1, D), jnp.float32)
        ln2b = jnp.zeros((1, D), jnp.float32)
        wfc = s * jax.random.normal(ks[2], (D, 4 * D), jnp.float32)
        bfc = jnp.zeros((1, 4 * D), jnp.float32)
        wproj = s * jax.random.normal(ks[3], (4 * D, D), jnp.float32)
        bproj = jnp.zeros((1, D), jnp.float32)
        layer_params.append((ln1w, ln1b, wqkv, bqkv, wo, bo,
                             ln2w, ln2b, wfc, bfc, wproj, bproj))
    return layer_params


if __name__ == "__main__":
    # Small shapes: Transformer(width=32, layers=2, heads=4), seq=8, batch=2.
    L, N, D, HEADS, LAYERS = 8, 2, 32, 4, 2

    key = jax.random.PRNGKey(0)
    k_x, k_p = jax.random.split(key)
    x = jax.random.normal(k_x, (L, N, D), jnp.float32)        # (seq, batch, width)
    params = init_params(k_p, D, LAYERS)

    out = transformer_forward(x, params, HEADS)
    out = jax.block_until_ready(out)

    ref = jax.block_until_ready(_reference_forward(x, params, HEADS))
    assert out.shape == (L, N, D)
    # bf16 MXU operands + approx reciprocal -> modest tolerance vs fp32 reference.
    np.testing.assert_allclose(np.asarray(out), np.asarray(ref),
                               rtol=2e-2, atol=2e-2)
    print("KERNEL_OK")
</pallas_src>

<mosaic_0001>
module attributes {stable_mosaic.version = 11 : i64} {
  func.func @_transformer_kernel(%arg0: i32, %arg1: i32, %arg2: memref<1x8x32xf32, #tpu.memory_space<vmem>>, %arg3: memref<1x1x32xf32, #tpu.memory_space<vmem>>, %arg4: memref<1x1x32xf32, #tpu.memory_space<vmem>>, %arg5: memref<1x32x96xbf16, #tpu.memory_space<vmem>>, %arg6: memref<1x1x96xf32, #tpu.memory_space<vmem>>, %arg7: memref<1x32x32xbf16, #tpu.memory_space<vmem>>, %arg8: memref<1x1x32xf32, #tpu.memory_space<vmem>>, %arg9: memref<1x1x32xf32, #tpu.memory_space<vmem>>, %arg10: memref<1x1x32xf32, #tpu.memory_space<vmem>>, %arg11: memref<1x32x128xbf16, #tpu.memory_space<vmem>>, %arg12: memref<1x1x128xf32, #tpu.memory_space<vmem>>, %arg13: memref<1x128x32xbf16, #tpu.memory_space<vmem>>, %arg14: memref<1x1x32xf32, #tpu.memory_space<vmem>>, %arg15: memref<1x8x32xf32, #tpu.memory_space<vmem>>) attributes {dimension_semantics = [#tpu.dimension_semantics<parallel>, #tpu.dimension_semantics<arbitrary>], iteration_bounds = array<i64: 2, 2>, scalar_prefetch = 0 : i64, scratch_operands = 0 : i64, tpu.core_type = #tpu.core_type<tc>, window_params = [{transform_indices = @transform_0, window_bounds = array<i64: 1, 8, 32>}, {transform_indices = @transform_1, window_bounds = array<i64: 1, 1, 32>}, {transform_indices = @transform_2, window_bounds = array<i64: 1, 1, 32>}, {transform_indices = @transform_3, window_bounds = array<i64: 1, 32, 96>}, {transform_indices = @transform_4, window_bounds = array<i64: 1, 1, 96>}, {transform_indices = @transform_5, window_bounds = array<i64: 1, 32, 32>}, {transform_indices = @transform_6, window_bounds = array<i64: 1, 1, 32>}, {transform_indices = @transform_7, window_bounds = array<i64: 1, 1, 32>}, {transform_indices = @transform_8, window_bounds = array<i64: 1, 1, 32>}, {transform_indices = @transform_9, window_bounds = array<i64: 1, 32, 128>}, {transform_indices = @transform_10, window_bounds = array<i64: 1, 1, 128>}, {transform_indices = @transform_11, window_bounds = array<i64: 1, 128, 32>}, {transform_indices = @transform_12, window_bounds = array<i64: 1, 1, 32>}, {transform_indices = @transform_13, window_bounds = array<i64: 1, 8, 32>}]} {
    %c0_i32 = arith.constant 0 : i32
    %0 = arith.cmpi eq, %arg1, %c0_i32 : i32
    %1 = arith.extui %0 : i1 to i32
    %c0_i32_0 = arith.constant 0 : i32
    %2 = arith.cmpi ne, %1, %c0_i32_0 : i32
    scf.if %2 {
      %c0_61 = arith.constant 0 : index
      %c0_62 = arith.constant 0 : index
      %c0_63 = arith.constant 0 : index
      %133 = vector.load %arg2[%c0_61, %c0_62, %c0_63] : memref<1x8x32xf32, #tpu.memory_space<vmem>>, vector<1x8x32xf32>
      %134 = vector.shape_cast %133 : vector<1x8x32xf32> to vector<8x32xf32>
      %c0_64 = arith.constant 0 : index
      %c0_65 = arith.constant 0 : index
      %c0_66 = arith.constant 0 : index
      %135 = vector.load %arg15[%c0_64, %c0_65, %c0_66] : memref<1x8x32xf32, #tpu.memory_space<vmem>>, vector<1x8x32xf32>
      %136 = vector.shape_cast %135 : vector<1x8x32xf32> to vector<8x32xf32>
      %137 = vector.shape_cast %134 : vector<8x32xf32> to vector<1x8x32xf32>
      tpu.vector_store %arg15[%c0_64, %c0_65, %c0_66], %137 {strides = array<i32>} : memref<1x8x32xf32, #tpu.memory_space<vmem>>, vector<1x8x32xf32>,
    } else {
    }
    %c0 = arith.constant 0 : index
    %c0_1 = arith.constant 0 : index
    %c0_2 = arith.constant 0 : index
    %3 = vector.load %arg15[%c0, %c0_1, %c0_2] : memref<1x8x32xf32, #tpu.memory_space<vmem>>, vector<1x8x32xf32>
    %4 = vector.shape_cast %3 : vector<1x8x32xf32> to vector<8x32xf32>
    %cst = arith.constant dense<0.000000e+00> : vector<8xf32>
    %5 = vector.multi_reduction <add>, %4, %cst [1] : vector<8x32xf32> to vector<8xf32>
    %6 = vector.shape_cast %5 : vector<8xf32> to vector<8x1xf32>
    %cst_3 = arith.constant 3.200000e+01 : f32
    %7 = vector.broadcast %cst_3 : f32 to vector<8x1xf32>
    %8 = arith.divf %6, %7 : vector<8x1xf32>
    %9 = vector.broadcast %8 : vector<8x1xf32> to vector<8x32xf32>
    %10 = arith.subf %4, %9 : vector<8x32xf32>
    %11 = arith.mulf %10, %10 : vector<8x32xf32>
    %cst_4 = arith.constant dense<0.000000e+00> : vector<8xf32>
    %12 = vector.multi_reduction <add>, %11, %cst_4 [1] : vector<8x32xf32> to vector<8xf32>
    %13 = vector.shape_cast %12 : vector<8xf32> to vector<8x1xf32>
    %cst_5 = arith.constant 3.200000e+01 : f32
    %14 = vector.broadcast %cst_5 : f32 to vector<8x1xf32>
    %15 = arith.divf %13, %14 : vector<8x1xf32>
    %16 = vector.broadcast %8 : vector<8x1xf32> to vector<8x32xf32>
    %17 = arith.subf %4, %16 : vector<8x32xf32>
    %cst_6 = arith.constant 9.99999974E-6 : f32
    %18 = vector.broadcast %cst_6 : f32 to vector<8x1xf32>
    %19 = arith.addf %15, %18 : vector<8x1xf32>
    %20 = math.rsqrt %19 : vector<8x1xf32>
    %21 = vector.broadcast %20 : vector<8x1xf32> to vector<8x32xf32>
    %22 = arith.mulf %17, %21 : vector<8x32xf32>
    %c0_7 = arith.constant 0 : index
    %c0_8 = arith.constant 0 : index
    %c0_9 = arith.constant 0 : index
    %23 = vector.load %arg3[%c0_7, %c0_8, %c0_9] : memref<1x1x32xf32, #tpu.memory_space<vmem>>, vector<1x1x32xf32>
    %24 = vector.shape_cast %23 : vector<1x1x32xf32> to vector<1x32xf32>
    %25 = vector.broadcast %24 : vector<1x32xf32> to vector<8x32xf32>
    %26 = arith.mulf %22, %25 : vector<8x32xf32>
    %c0_10 = arith.constant 0 : index
    %c0_11 = arith.constant 0 : index
    %c0_12 = arith.constant 0 : index
    %27 = vector.load %arg4[%c0_10, %c0_11, %c0_12] : memref<1x1x32xf32, #tpu.memory_space<vmem>>, vector<1x1x32xf32>
    %28 = vector.shape_cast %27 : vector<1x1x32xf32> to vector<1x32xf32>
    %29 = vector.broadcast %28 : vector<1x32xf32> to vector<8x32xf32>
    %30 = arith.addf %26, %29 : vector<8x32xf32>
    %31 = arith.truncf %30 : vector<8x32xf32> to vector<8x32xbf16>
    %c0_13 = arith.constant 0 : index
    %c0_14 = arith.constant 0 : index
    %c0_15 = arith.constant 0 : index
    %32 = vector.load %arg5[%c0_13, %c0_14, %c0_15] : memref<1x32x96xbf16, #tpu.memory_space<vmem>>, vector<1x32x96xbf16>
    %33 = vector.shape_cast %32 : vector<1x32x96xbf16> to vector<32x96xbf16>
    %cst_16 = arith.constant dense<0.000000e+00> : vector<8x96xf32>
    %34 = tpu.matmul %31, %33, %cst_16 {dimension_numbers = #tpu.dot_dimension_numbers<[1], [0], [0], [1], [0, 0, 1, 1], [], []>} : vector<8x32xbf16>, vector<32x96xbf16>, vector<8x96xf32> -> vector<8x96xf32>
    %c0_17 = arith.constant 0 : index
    %c0_18 = arith.constant 0 : index
    %c0_19 = arith.constant 0 : index
    %35 = vector.load %arg6[%c0_17, %c0_18, %c0_19] : memref<1x1x96xf32, #tpu.memory_space<vmem>>, vector<1x1x96xf32>
    %36 = vector.shape_cast %35 : vector<1x1x96xf32> to vector<1x96xf32>
    %37 = vector.broadcast %36 : vector<1x96xf32> to vector<8x96xf32>
    %38 = arith.addf %34, %37 : vector<8x96xf32>
    %39 = vector.extract_strided_slice %38 {offsets = [0, 0], sizes = [8, 32], strides = [1, 1]} : vector<8x96xf32> to vector<8x32xf32>
    %40 = vector.shape_cast %39 : vector<8x32xf32> to vector<1x8x4x8xf32>
    %41 = tpu.transpose %40, [0, 2, 1, 3] : vector<1x8x4x8xf32> -> vector<1x4x8x8xf32>
    %42 = vector.shape_cast %41 : vector<1x4x8x8xf32> to vector<4x8x8xf32>
    %43 = arith.truncf %42 : vector<4x8x8xf32> to vector<4x8x8xbf16>
    %44 = vector.extract_strided_slice %38 {offsets = [0, 32], sizes = [8, 32], strides = [1, 1]} : vector<8x96xf32> to vector<8x32xf32>
    %45 = vector.shape_cast %44 : vector<8x32xf32> to vector<1x8x4x8xf32>
    %46 = tpu.transpose %45, [0, 2, 1, 3] : vector<1x8x4x8xf32> -> vector<1x4x8x8xf32>
    %47 = vector.shape_cast %46 : vector<1x4x8x8xf32> to vector<4x8x8xf32>
    %48 = arith.truncf %47 : vector<4x8x8xf32> to vector<4x8x8xbf16>
    %49 = vector.extract_strided_slice %38 {offsets = [0, 64], sizes = [8, 32], strides = [1, 1]} : vector<8x96xf32> to vector<8x32xf32>
    %50 = vector.shape_cast %49 : vector<8x32xf32> to vector<1x8x4x8xf32>
    %51 = tpu.transpose %50, [0, 2, 1, 3] : vector<1x8x4x8xf32> -> vector<1x4x8x8xf32>
    %52 = vector.shape_cast %51 : vector<1x4x8x8xf32> to vector<4x8x8xf32>
    %53 = arith.truncf %52 : vector<4x8x8xf32> to vector<4x8x8xbf16>
    "tpu.trace_start"() <{level = 10 : i32, message = "bqd,bkd->bqk"}> : () -> ()
    %cst_20 = arith.constant dense<0.000000e+00> : vector<4x8x8xf32>
    %54 = tpu.matmul %43, %48, %cst_20 {dimension_numbers = #tpu.dot_dimension_numbers<[2], [2], [1], [1], [0, 0, 0, 1, 1, 1], [0], [0]>} : vector<4x8x8xbf16>, vector<4x8x8xbf16>, vector<4x8x8xf32> -> vector<4x8x8xf32>
    "tpu.trace_stop"() : () -> ()
    %cst_21 = arith.constant dense<0xFF800000> : vector<4x8xf32>
    %55 = vector.multi_reduction <maximumf>, %54, %cst_21 [2] : vector<4x8x8xf32> to vector<4x8xf32>
    %56 = vector.shape_cast %55 : vector<4x8xf32> to vector<4x8x1xf32>
    %57 = vector.broadcast %56 : vector<4x8x1xf32> to vector<4x8x8xf32>
    %58 = arith.subf %54, %57 : vector<4x8x8xf32>
    %59 = math.exp %58 : vector<4x8x8xf32>
    %cst_22 = arith.constant dense<0.000000e+00> : vector<4x8xf32>
    %60 = vector.multi_reduction <add>, %59, %cst_22 [2] : vector<4x8x8xf32> to vector<4x8xf32>
    %61 = vector.shape_cast %60 : vector<4x8xf32> to vector<4x8x1xf32>
    %62 = tpu.reciprocal %61 {approx = true} : vector<4x8x1xf32> -> vector<4x8x1xf32>
    %63 = arith.truncf %59 : vector<4x8x8xf32> to vector<4x8x8xbf16>
    "tpu.trace_start"() <{level = 10 : i32, message = "bqk,bkd->bqd"}> : () -> ()
    %cst_23 = arith.constant dense<0.000000e+00> : vector<4x8x8xf32>
    %64 = tpu.matmul %63, %53, %cst_23 {dimension_numbers = #tpu.dot_dimension_numbers<[2], [1], [1], [2], [0, 0, 0, 1, 1, 2], [0], [0]>} : vector<4x8x8xbf16>, vector<4x8x8xbf16>, vector<4x8x8xf32> -> vector<4x8x8xf32>
    "tpu.trace_stop"() : () -> ()
    %65 = vector.broadcast %62 : vector<4x8x1xf32> to vector<4x8x8xf32>
    %66 = arith.mulf %64, %65 : vector<4x8x8xf32>
    %67 = vector.shape_cast %66 : vector<4x8x8xf32> to vector<1x4x8x8xf32>
    %68 = tpu.transpose %67, [0, 2, 1, 3] : vector<1x4x8x8xf32> -> vector<1x8x4x8xf32>
    %69 = vector.shape_cast %68 : vector<1x8x4x8xf32> to vector<8x32xf32>
    %70 = arith.truncf %69 : vector<8x32xf32> to vector<8x32xbf16>
    %c0_24 = arith.constant 0 : index
    %c0_25 = arith.constant 0 : index
    %c0_26 = arith.constant 0 : index
    %71 = vector.load %arg7[%c0_24, %c0_25, %c0_26] : memref<1x32x32xbf16, #tpu.memory_space<vmem>>, vector<1x32x32xbf16>
    %72 = vector.shape_cast %71 : vector<1x32x32xbf16> to vector<32x32xbf16>
    %cst_27 = arith.constant dense<0.000000e+00> : vector<8x32xf32>
    %73 = tpu.matmul %70, %72, %cst_27 {dimension_numbers = #tpu.dot_dimension_numbers<[1], [0], [0], [1], [0, 0, 1, 1], [], []>} : vector<8x32xbf16>, vector<32x32xbf16>, vector<8x32xf32> -> vector<8x32xf32>
    %c0_28 = arith.constant 0 : index
    %c0_29 = arith.constant 0 : index
    %c0_30 = arith.constant 0 : index
    %74 = vector.load %arg8[%c0_28, %c0_29, %c0_30] : memref<1x1x32xf32, #tpu.memory_space<vmem>>, vector<1x1x32xf32>
    %75 = vector.shape_cast %74 : vector<1x1x32xf32> to vector<1x32xf32>
    %76 = vector.broadcast %75 : vector<1x32xf32> to vector<8x32xf32>
    %77 = arith.addf %73, %76 : vector<8x32xf32>
    %78 = arith.addf %4, %77 : vector<8x32xf32>
    %cst_31 = arith.constant dense<0.000000e+00> : vector<8xf32>
    %79 = vector.multi_reduction <add>, %78, %cst_31 [1] : vector<8x32xf32> to vector<8xf32>
    %80 = vector.shape_cast %79 : vector<8xf32> to vector<8x1xf32>
    %cst_32 = arith.constant 3.200000e+01 : f32
    %81 = vector.broadcast %cst_32 : f32 to vector<8x1xf32>
    %82 = arith.divf %80, %81 : vector<8x1xf32>
    %83 = vector.broadcast %82 : vector<8x1xf32> to vector<8x32xf32>
    %84 = arith.subf %78, %83 : vector<8x32xf32>
    %85 = arith.mulf %84, %84 : vector<8x32xf32>
    %cst_33 = arith.constant dense<0.000000e+00> : vector<8xf32>
    %86 = vector.multi_reduction <add>, %85, %cst_33 [1] : vector<8x32xf32> to vector<8xf32>
    %87 = vector.shape_cast %86 : vector<8xf32> to vector<8x1xf32>
    %cst_34 = arith.constant 3.200000e+01 : f32
    %88 = vector.broadcast %cst_34 : f32 to vector<8x1xf32>
    %89 = arith.divf %87, %88 : vector<8x1xf32>
    %90 = vector.broadcast %82 : vector<8x1xf32> to vector<8x32xf32>
    %91 = arith.subf %78, %90 : vector<8x32xf32>
    %cst_35 = arith.constant 9.99999974E-6 : f32
    %92 = vector.broadcast %cst_35 : f32 to vector<8x1xf32>
    %93 = arith.addf %89, %92 : vector<8x1xf32>
    %94 = math.rsqrt %93 : vector<8x1xf32>
    %95 = vector.broadcast %94 : vector<8x1xf32> to vector<8x32xf32>
    %96 = arith.mulf %91, %95 : vector<8x32xf32>
    %c0_36 = arith.constant 0 : index
    %c0_37 = arith.constant 0 : index
    %c0_38 = arith.constant 0 : index
    %97 = vector.load %arg9[%c0_36, %c0_37, %c0_38] : memref<1x1x32xf32, #tpu.memory_space<vmem>>, vector<1x1x32xf32>
    %98 = vector.shape_cast %97 : vector<1x1x32xf32> to vector<1x32xf32>
    %99 = vector.broadcast %98 : vector<1x32xf32> to vector<8x32xf32>
    %100 = arith.mulf %96, %99 : vector<8x32xf32>
    %c0_39 = arith.constant 0 : index
    %c0_40 = arith.constant 0 : index
    %c0_41 = arith.constant 0 : index
    %101 = vector.load %arg10[%c0_39, %c0_40, %c0_41] : memref<1x1x32xf32, #tpu.memory_space<vmem>>, vector<1x1x32xf32>
    %102 = vector.shape_cast %101 : vector<1x1x32xf32> to vector<1x32xf32>
    %103 = vector.broadcast %102 : vector<1x32xf32> to vector<8x32xf32>
    %104 = arith.addf %100, %103 : vector<8x32xf32>
    %105 = arith.truncf %104 : vector<8x32xf32> to vector<8x32xbf16>
    %c0_42 = arith.constant 0 : index
    %c0_43 = arith.constant 0 : index
    %c0_44 = arith.constant 0 : index
    %106 = vector.load %arg14[%c0_42, %c0_43, %c0_44] : memref<1x1x32xf32, #tpu.memory_space<vmem>>, vector<1x1x32xf32>
    %107 = vector.shape_cast %106 : vector<1x1x32xf32> to vector<1x32xf32>
    %108 = vector.broadcast %107 : vector<1x32xf32> to vector<8x32xf32>
    %109 = arith.addf %78, %108 : vector<8x32xf32>
    %c0_45 = arith.constant 0 : index
    %c0_46 = arith.constant 0 : index
    %c0_47 = arith.constant 0 : index
    %110 = vector.load %arg11[%c0_45, %c0_46, %c0_47] : memref<1x32x128xbf16, #tpu.memory_space<vmem>>, vector<1x32x128xbf16>
    %111 = vector.shape_cast %110 : vector<1x32x128xbf16> to vector<32x128xbf16>
    %cst_48 = arith.constant dense<0.000000e+00> : vector<8x128xf32>
    %112 = tpu.matmul %105, %111, %cst_48 {dimension_numbers = #tpu.dot_dimension_numbers<[1], [0], [0], [1], [0, 0, 1, 1], [], []>} : vector<8x32xbf16>, vector<32x128xbf16>, vector<8x128xf32> -> vector<8x128xf32>
    %c0_49 = arith.constant 0 : index
    %c0_50 = arith.constant 0 : index
    %c0_51 = arith.constant 0 : index
    %113 = vector.load %arg12[%c0_49, %c0_50, %c0_51] : memref<1x1x128xf32, #tpu.memory_space<vmem>>, vector<1x1x128xf32>
    %114 = vector.shape_cast %113 : vector<1x1x128xf32> to vector<1x128xf32>
    %115 = vector.broadcast %114 : vector<1x128xf32> to vector<8x128xf32>
    %116 = arith.addf %112, %115 : vector<8x128xf32>
    %cst_52 = arith.constant 1.702000e+00 : f32
    %117 = vector.broadcast %cst_52 : f32 to vector<8x128xf32>
    %118 = arith.mulf %117, %116 : vector<8x128xf32>
    %119 = arith.negf %118 : vector<8x128xf32>
    %120 = math.exp %119 : vector<8x128xf32>
    %cst_53 = arith.constant 1.000000e+00 : f32
    %121 = vector.broadcast %cst_53 : f32 to vector<8x128xf32>
    %122 = arith.addf %121, %120 : vector<8x128xf32>
    %123 = arith.divf %121, %122 : vector<8x128xf32>
    %124 = arith.mulf %116, %123 : vector<8x128xf32>
    %125 = arith.truncf %124 : vector<8x128xf32> to vector<8x128xbf16>
    %c0_54 = arith.constant 0 : index
    %c0_55 = arith.constant 0 : index
    %c0_56 = arith.constant 0 : index
    %126 = vector.load %arg13[%c0_54, %c0_55, %c0_56] : memref<1x128x32xbf16, #tpu.memory_space<vmem>>, vector<1x128x32xbf16>
    %127 = vector.shape_cast %126 : vector<1x128x32xbf16> to vector<128x32xbf16>
    %cst_57 = arith.constant dense<0.000000e+00> : vector<8x32xf32>
    %128 = tpu.matmul %125, %127, %cst_57 {dimension_numbers = #tpu.dot_dimension_numbers<[1], [0], [0], [1], [0, 0, 1, 1], [], []>} : vector<8x128xbf16>, vector<128x32xbf16>, vector<8x32xf32> -> vector<8x32xf32>
    %129 = arith.addf %109, %128 : vector<8x32xf32>
    %c0_58 = arith.constant 0 : index
    %c0_59 = arith.constant 0 : index
    %c0_60 = arith.constant 0 : index
    %130 = vector.load %arg15[%c0_58, %c0_59, %c0_60] : memref<1x8x32xf32, #tpu.memory_space<vmem>>, vector<1x8x32xf32>
    %131 = vector.shape_cast %130 : vector<1x8x32xf32> to vector<8x32xf32>
    %132 = vector.shape_cast %129 : vector<8x32xf32> to vector<1x8x32xf32>
    tpu.vector_store %arg15[%c0_58, %c0_59, %c0_60], %132 {strides = array<i32>} : memref<1x8x32xf32, #tpu.memory_space<vmem>>, vector<1x8x32xf32>,
    return
  }
  func.func @transform_0(%arg0: i32, %arg1: i32) -> (i32, i32, i32) {
    %c0_i32 = arith.constant 0 : i32
    %c0_i32_0 = arith.constant 0 : i32
    %c0_i32_1 = arith.constant 0 : i32
    return %arg0, %c0_i32, %c0_i32_0 : i32, i32, i32
  }
  func.func @transform_1(%arg0: i32, %arg1: i32) -> (i32, i32, i32) {
    %c0_i32 = arith.constant 0 : i32
    %c0_i32_0 = arith.constant 0 : i32
    %c0_i32_1 = arith.constant 0 : i32
    return %arg1, %c0_i32, %c0_i32_0 : i32, i32, i32
  }
  func.func @transform_2(%arg0: i32, %arg1: i32) -> (i32, i32, i32) {
    %c0_i32 = arith.constant 0 : i32
    %c0_i32_0 = arith.constant 0 : i32
    %c0_i32_1 = arith.constant 0 : i32
    return %arg1, %c0_i32, %c0_i32_0 : i32, i32, i32
  }
  func.func @transform_3(%arg0: i32, %arg1: i32) -> (i32, i32, i32) {
    %c0_i32 = arith.constant 0 : i32
    %c0_i32_0 = arith.constant 0 : i32
    %c0_i32_1 = arith.constant 0 : i32
    return %arg1, %c0_i32, %c0_i32_0 : i32, i32, i32
  }
  func.func @transform_4(%arg0: i32, %arg1: i32) -> (i32, i32, i32) {
    %c0_i32 = arith.constant 0 : i32
    %c0_i32_0 = arith.constant 0 : i32
    %c0_i32_1 = arith.constant 0 : i32
    return %arg1, %c0_i32, %c0_i32_0 : i32, i32, i32
  }
  func.func @transform_5(%arg0: i32, %arg1: i32) -> (i32, i32, i32) {
    %c0_i32 = arith.constant 0 : i32
    %c0_i32_0 = arith.constant 0 : i32
    %c0_i32_1 = arith.constant 0 : i32
    return %arg1, %c0_i32, %c0_i32_0 : i32, i32, i32
  }
  func.func @transform_6(%arg0: i32, %arg1: i32) -> (i32, i32, i32) {
    %c0_i32 = arith.constant 0 : i32
    %c0_i32_0 = arith.constant 0 : i32
    %c0_i32_1 = arith.constant 0 : i32
    return %arg1, %c0_i32, %c0_i32_0 : i32, i32, i32
  }
  func.func @transform_7(%arg0: i32, %arg1: i32) -> (i32, i32, i32) {
    %c0_i32 = arith.constant 0 : i32
    %c0_i32_0 = arith.constant 0 : i32
    %c0_i32_1 = arith.constant 0 : i32
    return %arg1, %c0_i32, %c0_i32_0 : i32, i32, i32
  }
  func.func @transform_8(%arg0: i32, %arg1: i32) -> (i32, i32, i32) {
    %c0_i32 = arith.constant 0 : i32
    %c0_i32_0 = arith.constant 0 : i32
    %c0_i32_1 = arith.constant 0 : i32
    return %arg1, %c0_i32, %c0_i32_0 : i32, i32, i32
  }
  func.func @transform_9(%arg0: i32, %arg1: i32) -> (i32, i32, i32) {
    %c0_i32 = arith.constant 0 : i32
    %c0_i32_0 = arith.constant 0 : i32
    %c0_i32_1 = arith.constant 0 : i32
    return %arg1, %c0_i32, %c0_i32_0 : i32, i32, i32
  }
  func.func @transform_10(%arg0: i32, %arg1: i32) -> (i32, i32, i32) {
    %c0_i32 = arith.constant 0 : i32
    %c0_i32_0 = arith.constant 0 : i32
    %c0_i32_1 = arith.constant 0 : i32
    return %arg1, %c0_i32, %c0_i32_0 : i32, i32, i32
  }
  func.func @transform_11(%arg0: i32, %arg1: i32) -> (i32, i32, i32) {
    %c0_i32 = arith.constant 0 : i32
    %c0_i32_0 = arith.constant 0 : i32
    %c0_i32_1 = arith.constant 0 : i32
    return %arg1, %c0_i32, %c0_i32_0 : i32, i32, i32
  }
  func.func @transform_12(%arg0: i32, %arg1: i32) -> (i32, i32, i32) {
    %c0_i32 = arith.constant 0 : i32
    %c0_i32_0 = arith.constant 0 : i32
    %c0_i32_1 = arith.constant 0 : i32
    return %arg1, %c0_i32, %c0_i32_0 : i32, i32, i32
  }
  func.func @transform_13(%arg0: i32, %arg1: i32) -> (i32, i32, i32) {
    %c0_i32 = arith.constant 0 : i32
    %c0_i32_0 = arith.constant 0 : i32
    %c0_i32_1 = arith.constant 0 : i32
    return %arg0, %c0_i32, %c0_i32_0 : i32, i32, i32
  }
}

</mosaic_0001>

<llo_original>
// kernel: tpu_custom_call.1
$region0: #{tpu_custom_call.1}
  #allocation0 [shape = 'u32[]', space=smem, size = 0x4, offset = 0x4, fixed_abs, tag = 'smem constant byte address 0x4 - core index']
  #allocation1 [shape = 'u32[72,128]{1,0:T(1,128)}', space=vmem, size = 0x9000, scoped, tag = 'internal scratch']
  %s0 = inlined_call_operand.vmem [shape: f32[2,8,32], index: 0, kind: input, shape index: {}]
  %s1 = inlined_call_operand.vmem [shape: f32[2,1,32], index: 1, kind: input, shape index: {}]
  %s2 = inlined_call_operand.vmem [shape: f32[2,1,32], index: 2, kind: input, shape index: {}]
  %s3 = inlined_call_operand.vmem [shape: bf16[2,32,96], index: 3, kind: input, shape index: {}]
  %s4 = inlined_call_operand.vmem [shape: f32[2,1,96], index: 4, kind: input, shape index: {}]
  %s5 = inlined_call_operand.vmem [shape: bf16[2,32,32], index: 5, kind: input, shape index: {}]
  %s6 = inlined_call_operand.vmem [shape: f32[2,1,32], index: 6, kind: input, shape index: {}]
  %s7 = inlined_call_operand.vmem [shape: f32[2,1,32], index: 7, kind: input, shape index: {}]
  %s8 = inlined_call_operand.vmem [shape: f32[2,1,32], index: 8, kind: input, shape index: {}]
  %s9 = inlined_call_operand.vmem [shape: bf16[2,32,128], index: 9, kind: input, shape index: {}]
  %s10 = inlined_call_operand.vmem [shape: f32[2,1,128], index: 10, kind: input, shape index: {}]
  %s11 = inlined_call_operand.vmem [shape: bf16[2,128,32], index: 11, kind: input, shape index: {}]
  %s12 = inlined_call_operand.vmem [shape: f32[2,1,32], index: 12, kind: input, shape index: {}]
  %s13 = inlined_call_operand.hbm [shape: f32[2,8,32], index: 13, kind: output, shape index: {}]
  %s14 = sld [smem:[#allocation0]]
  $region89: #{tpu_custom_call.1} parent=0
    _
  %s16 = ssub.s32 1, %s14
  %s17 = scalar_select 0, %s16, %s14
  $region1: #{tpu_custom_call.1} parent=0
    #allocation2 [shape = 'u8[8192]{0}', space=vmem, size = 0x2000, scoped, tag = 'output window, operand 0']
    #allocation3 [shape = 's32[2]{0}', space=sflag, size = 0x8, scoped, tag = 'scoped memory for tpu_custom_call.1']
    %18 = vsyncpa [#allocation3], 0
    %s19 = scalar_lea.sflag [#allocation3], 1
    %20 = vsyncpa %s19, 0
    loop: start=0, step=1, limit=6
    $region2: #{tpu_custom_call.1} parent=1 // loop_pre_header
      _
    $region3: #{tpu_custom_call.1} parent=1 // loop_header
      %s22 = sphi 0, %s26
      %p23 = scmp.ge.s32.totalorder %s22, 6
      %s29 = sphi 0, %s41
      %s30 = sphi 0, %s37
      %s31 = sphi 0, %s29
      %s32 = sphi 0, %s30
      %s33 = sphi 0, %s31
      %s34 = sphi 0, %s32
      %s44 = sphi 0, %s46
      %s47 = sphi 0, %s44
      %s48 = sphi 0, %s47
      %s64 = sphi 0, %s48
      %s70 = sphi 0, %s72
      %s73 = sphi 0, %s70
      %s74 = sphi 0, %s73
      %s90 = sphi 0, %s74
      %s96 = sphi 0, %s98
      %s99 = sphi 0, %s96
      %s100 = sphi 0, %s99
      %s116 = sphi 0, %s100
      %s122 = sphi 0, %s124
      %s125 = sphi 0, %s122
      %s126 = sphi 0, %s125
      %s142 = sphi 0, %s126
      %s148 = sphi 0, %s150
      %s151 = sphi 0, %s148
      %s152 = sphi 0, %s151
      %s168 = sphi 0, %s152
      %s174 = sphi 0, %s176
      %s177 = sphi 0, %s174
      %s178 = sphi 0, %s177
      %s194 = sphi 0, %s178
      %s200 = sphi 0, %s202
      %s203 = sphi 0, %s200
      %s204 = sphi 0, %s203
      %s220 = sphi 0, %s204
      %s226 = sphi 0, %s228
      %s229 = sphi 0, %s226
      %s230 = sphi 0, %s229
      %s246 = sphi 0, %s230
      %s252 = sphi 0, %s254
      %s255 = sphi 0, %s252
      %s256 = sphi 0, %s255
      %s272 = sphi 0, %s256
      %s278 = sphi 0, %s280
      %s281 = sphi 0, %s278
      %s282 = sphi 0, %s281
      %s298 = sphi 0, %s282
      %s304 = sphi 0, %s306
      %s307 = sphi 0, %s304
      %s308 = sphi 0, %s307
      %s324 = sphi 0, %s308
      %s330 = sphi 0, %s332
      %s333 = sphi 0, %s330
      %s334 = sphi 0, %s333
      %s350 = sphi 0, %s334
      %s356 = sphi 0, %s358
      %s359 = sphi 0, %s356
      %s360 = sphi 0, %s359
      %s376 = sphi 0, %s360
      %s382 = sphi 0, %s384
      %s385 = sphi 0, %s382
      %s386 = sphi 0, %s385
      %s402 = sphi 0, %s386
    $region4: #{tpu_custom_call.1} parent=1 // loop_header_branch
      %25 = sbr.rel (%p23) target = $region8
    $region5: #{tpu_custom_call.1} parent=1 // loop_body
      %s27 = ssub.s32 %s22, 1
      %s28 = ssub.s32 %s22, 2
      %s35 = sadd.s32 1, %s30
      %p36 = scmp.ge.s32.totalorder %s35, 2
      %s37 = scalar_select %p36, 0, %s35
      %s38 = sadd.s32 1, %s29
      %s39 = scalar_select %p36, %s38, %s29
      %p40 = scmp.ge.s32.totalorder %s39, 2
      %s41 = scalar_select %p40, 0, %s39
      %s42 = ssub.s32 %s29, %s41
      %p43 = scmp.eq.s32.totalorder %s42, 0
      %s45 = sadd.s32 %s44, 1
      %s46 = scalar_select %p43, %s44, %s45
      %p49 = pneg %p43
      %p50 = scmp.eq.s32.totalorder %s22, 3
      %p51 = por %p49, %p50
      %p52 = scmp.ne.s32.totalorder %s44, %s47
      %p53 = scmp.eq.s32.totalorder %s22, 0
      %p54 = por %p52, %p53
      %p55 = scmp.ne.s32.totalorder %s44, %s47
      %p56 = scmp.eq.s32.totalorder %s27, 3
      %p57 = por %p55, %p56
      %p58 = scmp.ne.s32.totalorder %s47, %s48
      %p59 = scmp.eq.s32.totalorder %s27, 0
      %p60 = por %p58, %p59
      %p61 = scmp.ne.s32.totalorder %s47, %s48
      %p62 = scmp.eq.s32.totalorder %s28, 3
      %p63 = por %p61, %p62
      %p65 = scmp.ne.s32.totalorder %s48, %s64
      %p66 = scmp.eq.s32.totalorder %s28, 0
      %p67 = por %p65, %p66
      %s68 = ssub.s32 %s30, %s37
      %p69 = scmp.eq.s32.totalorder %s68, 0
      %s71 = sadd.s32 %s70, 1
      %s72 = scalar_select %p69, %s70, %s71
      %p75 = pneg %p69
      %p76 = scmp.eq.s32.totalorder %s22, 3
      %p77 = por %p75, %p76
      %p78 = scmp.ne.s32.totalorder %s70, %s73
      %p79 = scmp.eq.s32.totalorder %s22, 0
      %p80 = por %p78, %p79
      %p81 = scmp.ne.s32.totalorder %s70, %s73
      %p82 = scmp.eq.s32.totalorder %s27, 3
      %p83 = por %p81, %p82
      %p84 = scmp.ne.s32.totalorder %s73, %s74
      %p85 = scmp.eq.s32.totalorder %s27, 0
      %p86 = por %p84, %p85
      %p87 = scmp.ne.s32.totalorder %s73, %s74
      %p88 = scmp.eq.s32.totalorder %s28, 3
      %p89 = por %p87, %p88
      %p91 = scmp.ne.s32.totalorder %s74, %s90
      %p92 = scmp.eq.s32.totalorder %s28, 0
      %p93 = por %p91, %p92
      %s94 = ssub.s32 %s30, %s37
      %p95 = scmp.eq.s32.totalorder %s94, 0
      %s97 = sadd.s32 %s96, 1
      %s98 = scalar_select %p95, %s96, %s97
      %p101 = pneg %p95
      %p102 = scmp.eq.s32.totalorder %s22, 3
      %p103 = por %p101, %p102
      %p104 = scmp.ne.s32.totalorder %s96, %s99
      %p105 = scmp.eq.s32.totalorder %s22, 0
      %p106 = por %p104, %p105
      %p107 = scmp.ne.s32.totalorder %s96, %s99
      %p108 = scmp.eq.s32.totalorder %s27, 3
      %p109 = por %p107, %p108
      %p110 = scmp.ne.s32.totalorder %s99, %s100
      %p111 = scmp.eq.s32.totalorder %s27, 0
      %p112 = por %p110, %p111
      %p113 = scmp.ne.s32.totalorder %s99, %s100
      %p114 = scmp.eq.s32.totalorder %s28, 3
      %p115 = por %p113, %p114
      %p117 = scmp.ne.s32.totalorder %s100, %s116
      %p118 = scmp.eq.s32.totalorder %s28, 0
      %p119 = por %p117, %p118
      %s120 = ssub.s32 %s30, %s37
      %p121 = scmp.eq.s32.totalorder %s120, 0
      %s123 = sadd.s32 %s122, 1
      %s124 = scalar_select %p121, %s122, %s123
      %p127 = pneg %p121
      %p128 = scmp.eq.s32.totalorder %s22, 3
      %p129 = por %p127, %p128
      %p130 = scmp.ne.s32.totalorder %s122, %s125
      %p131 = scmp.eq.s32.totalorder %s22, 0
      %p132 = por %p130, %p131
      %p133 = scmp.ne.s32.totalorder %s122, %s125
      %p134 = scmp.eq.s32.totalorder %s27, 3
      %p135 = por %p133, %p134
      %p136 = scmp.ne.s32.totalorder %s125, %s126
      %p137 = scmp.eq.s32.totalorder %s27, 0
      %p138 = por %p136, %p137
      %p139 = scmp.ne.s32.totalorder %s125, %s126
      %p140 = scmp.eq.s32.totalorder %s28, 3
      %p141 = por %p139, %p140
      %p143 = scmp.ne.s32.totalorder %s126, %s142
      %p144 = scmp.eq.s32.totalorder %s28, 0
      %p145 = por %p143, %p144
      %s146 = ssub.s32 %s30, %s37
      %p147 = scmp.eq.s32.totalorder %s146, 0
      %s149 = sadd.s32 %s148, 1
      %s150 = scalar_select %p147, %s148, %s149
      %p153 = pneg %p147
      %p154 = scmp.eq.s32.totalorder %s22, 3
      %p155 = por %p153, %p154
      %p156 = scmp.ne.s32.totalorder %s148, %s151
      %p157 = scmp.eq.s32.totalorder %s22, 0
      %p158 = por %p156, %p157
      %p159 = scmp.ne.s32.totalorder %s148, %s151
      %p160 = scmp.eq.s32.totalorder %s27, 3
      %p161 = por %p159, %p160
      %p162 = scmp.ne.s32.totalorder %s151, %s152
      %p163 = scmp.eq.s32.totalorder %s27, 0
      %p164 = por %p162, %p163
      %p165 = scmp.ne.s32.totalorder %s151, %s152
      %p166 = scmp.eq.s32.totalorder %s28, 3
      %p167 = por %p165, %p166
      %p169 = scmp.ne.s32.totalorder %s152, %s168
      %p170 = scmp.eq.s32.totalorder %s28, 0
      %p171 = por %p169, %p170
      %s172 = ssub.s32 %s30, %s37
      %p173 = scmp.eq.s32.totalorder %s172, 0
      %s175 = sadd.s32 %s174, 1
      %s176 = scalar_select %p173, %s174, %s175
      %p179 = pneg %p173
      %p180 = scmp.eq.s32.totalorder %s22, 3
      %p181 = por %p179, %p180
      %p182 = scmp.ne.s32.totalorder %s174, %s177
      %p183 = scmp.eq.s32.totalorder %s22, 0
      %p184 = por %p182, %p183
      %p185 = scmp.ne.s32.totalorder %s174, %s177
      %p186 = scmp.eq.s32.totalorder %s27, 3
      %p187 = por %p185, %p186
      %p188 = scmp.ne.s32.totalorder %s177, %s178
      %p189 = scmp.eq.s32.totalorder %s27, 0
      %p190 = por %p188, %p189
      %p191 = scmp.ne.s32.totalorder %s177, %s178
      %p192 = scmp.eq.s32.totalorder %s28, 3
      %p193 = por %p191, %p192
      %p195 = scmp.ne.s32.totalorder %s178, %s194
      %p196 = scmp.eq.s32.totalorder %s28, 0
      %p197 = por %p195, %p196
      %s198 = ssub.s32 %s30, %s37
      %p199 = scmp.eq.s32.totalorder %s198, 0
      %s201 = sadd.s32 %s200, 1
      %s202 = scalar_select %p199, %s200, %s201
      %p205 = pneg %p199
      %p206 = scmp.eq.s32.totalorder %s22, 3
      %p207 = por %p205, %p206
      %p208 = scmp.ne.s32.totalorder %s200, %s203
      %p209 = scmp.eq.s32.totalorder %s22, 0
      %p210 = por %p208, %p209
      %p211 = scmp.ne.s32.totalorder %s200, %s203
      %p212 = scmp.eq.s32.totalorder %s27, 3
      %p213 = por %p211, %p212
      %p214 = scmp.ne.s32.totalorder %s203, %s204
      %p215 = scmp.eq.s32.totalorder %s27, 0
      %p216 = por %p214, %p215
      %p217 = scmp.ne.s32.totalorder %s203, %s204
      %p218 = scmp.eq.s32.totalorder %s28, 3
      %p219 = por %p217, %p218
      %p221 = scmp.ne.s32.totalorder %s204, %s220
      %p222 = scmp.eq.s32.totalorder %s28, 0
      %p223 = por %p221, %p222
      %s224 = ssub.s32 %s30, %s37
      %p225 = scmp.eq.s32.totalorder %s224, 0
      %s227 = sadd.s32 %s226, 1
      %s228 = scalar_select %p225, %s226, %s227
      %p231 = pneg %p225
      %p232 = scmp.eq.s32.totalorder %s22, 3
      %p233 = por %p231, %p232
      %p234 = scmp.ne.s32.totalorder %s226, %s229
      %p235 = scmp.eq.s32.totalorder %s22, 0
      %p236 = por %p234, %p235
      %p237 = scmp.ne.s32.totalorder %s226, %s229
      %p238 = scmp.eq.s32.totalorder %s27, 3
      %p239 = por %p237, %p238
      %p240 = scmp.ne.s32.totalorder %s229, %s230
      %p241 = scmp.eq.s32.totalorder %s27, 0
      %p242 = por %p240, %p241
      %p243 = scmp.ne.s32.totalorder %s229, %s230
      %p244 = scmp.eq.s32.totalorder %s28, 3
      %p245 = por %p243, %p244
      %p247 = scmp.ne.s32.totalorder %s230, %s246
      %p248 = scmp.eq.s32.totalorder %s28, 0
      %p249 = por %p247, %p248
      %s250 = ssub.s32 %s30, %s37
      %p251 = scmp.eq.s32.totalorder %s250, 0
      %s253 = sadd.s32 %s252, 1
      %s254 = scalar_select %p251, %s252, %s253
      %p257 = pneg %p251
      %p258 = scmp.eq.s32.totalorder %s22, 3
      %p259 = por %p257, %p258
      %p260 = scmp.ne.s32.totalorder %s252, %s255
      %p261 = scmp.eq.s32.totalorder %s22, 0
      %p262 = por %p260, %p261
      %p263 = scmp.ne.s32.totalorder %s252, %s255
      %p264 = scmp.eq.s32.totalorder %s27, 3
      %p265 = por %p263, %p264
      %p266 = scmp.ne.s32.totalorder %s255, %s256
      %p267 = scmp.eq.s32.totalorder %s27, 0
      %p268 = por %p266, %p267
      %p269 = scmp.ne.s32.totalorder %s255, %s256
      %p270 = scmp.eq.s32.totalorder %s28, 3
      %p271 = por %p269, %p270
      %p273 = scmp.ne.s32.totalorder %s256, %s272
      %p274 = scmp.eq.s32.totalorder %s28, 0
      %p275 = por %p273, %p274
      %s276 = ssub.s32 %s30, %s37
      %p277 = scmp.eq.s32.totalorder %s276, 0
      %s279 = sadd.s32 %s278, 1
      %s280 = scalar_select %p277, %s278, %s279
      %p283 = pneg %p277
      %p284 = scmp.eq.s32.totalorder %s22, 3
      %p285 = por %p283, %p284
      %p286 = scmp.ne.s32.totalorder %s278, %s281
      %p287 = scmp.eq.s32.totalorder %s22, 0
      %p288 = por %p286, %p287
      %p289 = scmp.ne.s32.totalorder %s278, %s281
      %p290 = scmp.eq.s32.totalorder %s27, 3
      %p291 = por %p289, %p290
      %p292 = scmp.ne.s32.totalorder %s281, %s282
      %p293 = scmp.eq.s32.totalorder %s27, 0
      %p294 = por %p292, %p293
      %p295 = scmp.ne.s32.totalorder %s281, %s282
      %p296 = scmp.eq.s32.totalorder %s28, 3
      %p297 = por %p295, %p296
      %p299 = scmp.ne.s32.totalorder %s282, %s298
      %p300 = scmp.eq.s32.totalorder %s28, 0
      %p301 = por %p299, %p300
      %s302 = ssub.s32 %s30, %s37
      %p303 = scmp.eq.s32.totalorder %s302, 0
      %s305 = sadd.s32 %s304, 1
      %s306 = scalar_select %p303, %s304, %s305
      %p309 = pneg %p303
      %p310 = scmp.eq.s32.totalorder %s22, 3
      %p311 = por %p309, %p310
      %p312 = scmp.ne.s32.totalorder %s304, %s307
      %p313 = scmp.eq.s32.totalorder %s22, 0
      %p314 = por %p312, %p313
      %p315 = scmp.ne.s32.totalorder %s304, %s307
      %p316 = scmp.eq.s32.totalorder %s27, 3
      %p317 = por %p315, %p316
      %p318 = scmp.ne.s32.totalorder %s307, %s308
      %p319 = scmp.eq.s32.totalorder %s27, 0
      %p320 = por %p318, %p319
      %p321 = scmp.ne.s32.totalorder %s307, %s308
      %p322 = scmp.eq.s32.totalorder %s28, 3
      %p323 = por %p321, %p322
      %p325 = scmp.ne.s32.totalorder %s308, %s324
      %p326 = scmp.eq.s32.totalorder %s28, 0
      %p327 = por %p325, %p326
      %s328 = ssub.s32 %s30, %s37
      %p329 = scmp.eq.s32.totalorder %s328, 0
      %s331 = sadd.s32 %s330, 1
      %s332 = scalar_select %p329, %s330, %s331
      %p335 = pneg %p329
      %p336 = scmp.eq.s32.totalorder %s22, 3
      %p337 = por %p335, %p336
      %p338 = scmp.ne.s32.totalorder %s330, %s333
      %p339 = scmp.eq.s32.totalorder %s22, 0
      %p340 = por %p338, %p339
      %p341 = scmp.ne.s32.totalorder %s330, %s333
      %p342 = scmp.eq.s32.totalorder %s27, 3
      %p343 = por %p341, %p342
      %p344 = scmp.ne.s32.totalorder %s333, %s334
      %p345 = scmp.eq.s32.totalorder %s27, 0
      %p346 = por %p344, %p345
      %p347 = scmp.ne.s32.totalorder %s333, %s334
      %p348 = scmp.eq.s32.totalorder %s28, 3
      %p349 = por %p347, %p348
      %p351 = scmp.ne.s32.totalorder %s334, %s350
      %p352 = scmp.eq.s32.totalorder %s28, 0
      %p353 = por %p351, %p352
      %s354 = ssub.s32 %s30, %s37
      %p355 = scmp.eq.s32.totalorder %s354, 0
      %s357 = sadd.s32 %s356, 1
      %s358 = scalar_select %p355, %s356, %s357
      %p361 = pneg %p355
      %p362 = scmp.eq.s32.totalorder %s22, 3
      %p363 = por %p361, %p362
      %p364 = scmp.ne.s32.totalorder %s356, %s359
      %p365 = scmp.eq.s32.totalorder %s22, 0
      %p366 = por %p364, %p365
      %p367 = scmp.ne.s32.totalorder %s356, %s359
      %p368 = scmp.eq.s32.totalorder %s27, 3
      %p369 = por %p367, %p368
      %p370 = scmp.ne.s32.totalorder %s359, %s360
      %p371 = scmp.eq.s32.totalorder %s27, 0
      %p372 = por %p370, %p371
      %p373 = scmp.ne.s32.totalorder %s359, %s360
      %p374 = scmp.eq.s32.totalorder %s28, 3
      %p375 = por %p373, %p374
      %p377 = scmp.ne.s32.totalorder %s360, %s376
      %p378 = scmp.eq.s32.totalorder %s28, 0
      %p379 = por %p377, %p378
      %s380 = ssub.s32 %s29, %s41
      %p381 = scmp.eq.s32.totalorder %s380, 0
      %s383 = sadd.s32 %s382, 1
      %s384 = scalar_select %p381, %s382, %s383
      %p387 = pneg %p381
      %p388 = scmp.eq.s32.totalorder %s22, 3
      %p389 = por %p387, %p388
      %p390 = scmp.ne.s32.totalorder %s382, %s385
      %p391 = scmp.eq.s32.totalorder %s22, 0
      %p392 = por %p390, %p391
      %p393 = scmp.ne.s32.totalorder %s382, %s385
      %p394 = scmp.eq.s32.totalorder %s27, 3
      %p395 = por %p393, %p394
      %p396 = scmp.ne.s32.totalorder %s385, %s386
      %p397 = scmp.eq.s32.totalorder %s27, 0
      %p398 = por %p396, %p397
      %p399 = scmp.ne.s32.totalorder %s385, %s386
      %p400 = scmp.eq.s32.totalorder %s28, 3
      %p401 = por %p399, %p400
      %p403 = scmp.ne.s32.totalorder %s386, %s402
      %p404 = scmp.eq.s32.totalorder %s28, 0
      %p405 = por %p403, %p404
      %p406 = scmp.le.s32.totalorder 1, %s22
      %p407 = scmp.lt.s32.totalorder %s22, 5
      %p408 = pnand %p406, %p407
      %p409 = pneg %p408
      // Predicated region
      $region9: #{tpu_custom_call.1} parent=5 // pred_check
        _
      $region10: #{tpu_custom_call.1} parent=5 // pred_check_branch
        %411 = sbr.rel (%p408) target = $region12
      $region11: #{tpu_custom_call.1} parent=5 // pred_region
        %s412 = ssub.s32 %s22, 1
      $region12: #{tpu_custom_call.1} parent=5 // pred_fallthru
        _
      %p413 = scmp.lt.s32.totalorder %s22, 4
      // Predicated region
      $region13: #{tpu_custom_call.1} parent=5 // pred_check
        %p414 = pneg %p413
      $region14: #{tpu_custom_call.1} parent=5 // pred_check_branch
        %416 = sbr.rel (%p414) target = $region16
      $region15: #{tpu_custom_call.1} parent=5 // pred_region
        // Predicated region
        $region17: #{tpu_custom_call.1} parent=15 // pred_check
          %p417 = pneg %p54
        $region18: #{tpu_custom_call.1} parent=15 // pred_check_branch
          %419 = sbr.rel (%p417) target = $region20
        $region19: #{tpu_custom_call.1} parent=15 // pred_region
          %p420 = scmp.lt.s32.totalorder %s29, 1
          %s421 = scalar_select %p420, %s29, 1
          %s422 = smul.addr %s421, 8
          %s423 = scalar_lea.vmem %s0, %s422
        $region20: #{tpu_custom_call.1} parent=15 // pred_fallthru
          _
        // Predicated region
        $region21: #{tpu_custom_call.1} parent=15 // pred_check
          %p424 = pneg %p80
        $region22: #{tpu_custom_call.1} parent=15 // pred_check_branch
          %426 = sbr.rel (%p424) target = $region24
        $region23: #{tpu_custom_call.1} parent=15 // pred_region
          %p427 = scmp.lt.s32.totalorder %s30, 1
          %s428 = scalar_select %p427, %s30, 1
          %s429 = scalar_lea.vmem %s1, %s428
        $region24: #{tpu_custom_call.1} parent=15 // pred_fallthru
          _
        // Predicated region
        $region25: #{tpu_custom_call.1} parent=15 // pred_check
          %p430 = pneg %p106
        $region26: #{tpu_custom_call.1} parent=15 // pred_check_branch
          %432 = sbr.rel (%p430) target = $region28
        $region27: #{tpu_custom_call.1} parent=15 // pred_region
          %p433 = scmp.lt.s32.totalorder %s30, 1
          %s434 = scalar_select %p433, %s30, 1
          %s435 = scalar_lea.vmem %s2, %s434
        $region28: #{tpu_custom_call.1} parent=15 // pred_fallthru
          _
        // Predicated region
        $region29: #{tpu_custom_call.1} parent=15 // pred_check
          %p436 = pneg %p132
        $region30: #{tpu_custom_call.1} parent=15 // pred_check_branch
          %438 = sbr.rel (%p436) target = $region32
        $region31: #{tpu_custom_call.1} parent=15 // pred_region
          %p439 = scmp.lt.s32.totalorder %s30, 1
          %s440 = scalar_select %p439, %s30, 1
          %s441 = smul.addr %s440, 4
          %s442 = smul.addr %s441, 4
          %s443 = scalar_lea.vmem %s3, %s442
        $region32: #{tpu_custom_call.1} parent=15 // pred_fallthru
          _
        // Predicated region
        $region33: #{tpu_custom_call.1} parent=15 // pred_check
          %p444 = pneg %p158
        $region34: #{tpu_custom_call.1} parent=15 // pred_check_branch
          %446 = sbr.rel (%p444) target = $region36
        $region35: #{tpu_custom_call.1} parent=15 // pred_region
          %p447 = scmp.lt.s32.totalorder %s30, 1
          %s448 = scalar_select %p447, %s30, 1
          %s449 = scalar_lea.vmem %s4, %s448
        $region36: #{tpu_custom_call.1} parent=15 // pred_fallthru
          _
        // Predicated region
        $region37: #{tpu_custom_call.1} parent=15 // pred_check
          %p450 = pneg %p184
        $region38: #{tpu_custom_call.1} parent=15 // pred_check_branch
          %452 = sbr.rel (%p450) target = $region40
        $region39: #{tpu_custom_call.1} parent=15 // pred_region
          %p453 = scmp.lt.s32.totalorder %s30, 1
          %s454 = scalar_select %p453, %s30, 1
          %s455 = smul.addr %s454, 4
          %s456 = smul.addr %s455, 4
          %s457 = scalar_lea.vmem %s5, %s456
        $region40: #{tpu_custom_call.1} parent=15 // pred_fallthru
          _
        // Predicated region
        $region41: #{tpu_custom_call.1} parent=15 // pred_check
          %p458 = pneg %p210
        $region42: #{tpu_custom_call.1} parent=15 // pred_check_branch
          %460 = sbr.rel (%p458) target = $region44
        $region43: #{tpu_custom_call.1} parent=15 // pred_region
          %p461 = scmp.lt.s32.totalorder %s30, 1
          %s462 = scalar_select %p461, %s30, 1
          %s463 = scalar_lea.vmem %s6, %s462
        $region44: #{tpu_custom_call.1} parent=15 // pred_fallthru
          _
        // Predicated region
        $region45: #{tpu_custom_call.1} parent=15 // pred_check
          %p464 = pneg %p236
        $region46: #{tpu_custom_call.1} parent=15 // pred_check_branch
          %466 = sbr.rel (%p464) target = $region48
        $region47: #{tpu_custom_call.1} parent=15 // pred_region
          %p467 = scmp.lt.s32.totalorder %s30, 1
          %s468 = scalar_select %p467, %s30, 1
          %s469 = scalar_lea.vmem %s7, %s468
        $region48: #{tpu_custom_call.1} parent=15 // pred_fallthru
          _
        // Predicated region
        $region49: #{tpu_custom_call.1} parent=15 // pred_check
          %p470 = pneg %p262
        $region50: #{tpu_custom_call.1} parent=15 // pred_check_branch
          %472 = sbr.rel (%p470) target = $region52
        $region51: #{tpu_custom_call.1} parent=15 // pred_region
          %p473 = scmp.lt.s32.totalorder %s30, 1
          %s474 = scalar_select %p473, %s30, 1
          %s475 = scalar_lea.vmem %s8, %s474
        $region52: #{tpu_custom_call.1} parent=15 // pred_fallthru
          _
        // Predicated region
        $region53: #{tpu_custom_call.1} parent=15 // pred_check
          %p476 = pneg %p288
        $region54: #{tpu_custom_call.1} parent=15 // pred_check_branch
          %478 = sbr.rel (%p476) target = $region56
        $region55: #{tpu_custom_call.1} parent=15 // pred_region
          %p479 = scmp.lt.s32.totalorder %s30, 1
          %s480 = scalar_select %p479, %s30, 1
          %s481 = smul.addr %s480, 4
          %s482 = smul.addr %s481, 4
          %s483 = scalar_lea.vmem %s9, %s482
        $region56: #{tpu_custom_call.1} parent=15 // pred_fallthru
          _
        // Predicated region
        $region57: #{tpu_custom_call.1} parent=15 // pred_check
          %p484 = pneg %p314
        $region58: #{tpu_custom_call.1} parent=15 // pred_check_branch
          %486 = sbr.rel (%p484) target = $region60
        $region59: #{tpu_custom_call.1} parent=15 // pred_region
          %p487 = scmp.lt.s32.totalorder %s30, 1
          %s488 = scalar_select %p487, %s30, 1
          %s489 = scalar_lea.vmem %s10, %s488
        $region60: #{tpu_custom_call.1} parent=15 // pred_fallthru
          _
        // Predicated region
        $region61: #{tpu_custom_call.1} parent=15 // pred_check
          %p490 = pneg %p340
        $region62: #{tpu_custom_call.1} parent=15 // pred_check_branch
          %492 = sbr.rel (%p490) target = $region64
        $region63: #{tpu_custom_call.1} parent=15 // pred_region
          %p493 = scmp.lt.s32.totalorder %s30, 1
          %s494 = scalar_select %p493, %s30, 1
          %s495 = smul.addr %s494, 16
          %s496 = smul.addr %s495, 4
          %s497 = scalar_lea.vmem %s11, %s496
        $region64: #{tpu_custom_call.1} parent=15 // pred_fallthru
          _
        // Predicated region
        $region65: #{tpu_custom_call.1} parent=15 // pred_check
          %p498 = pneg %p366
        $region66: #{tpu_custom_call.1} parent=15 // pred_check_branch
          %500 = sbr.rel (%p498) target = $region68
        $region67: #{tpu_custom_call.1} parent=15 // pred_region
          %p501 = scmp.lt.s32.totalorder %s30, 1
          %s502 = scalar_select %p501, %s30, 1
          %s503 = scalar_lea.vmem %s12, %s502
        $region68: #{tpu_custom_call.1} parent=15 // pred_fallthru
          _
      $region16: #{tpu_custom_call.1} parent=5 // pred_fallthru
        _
      %p504 = scmp.le.s32.totalorder 1, %s22
      %p505 = scmp.lt.s32.totalorder %s22, 5
      %p506 = pnand %p504, %p505
      %p507 = pneg %p506
      // Predicated region
      $region69: #{tpu_custom_call.1} parent=5 // pred_check
        _
      $region70: #{tpu_custom_call.1} parent=5 // pred_check_branch
        %509 = sbr.rel (%p506) target = $region72
      $region71: #{tpu_custom_call.1} parent=5 // pred_region
        %s510 = ssub.s32 %s22, 1
        %p511 = scmp.lt.s32.totalorder %s31, 1
        %s512 = scalar_select %p511, %s31, 1
        %s513 = smul.addr %s512, 8
        %s514 = scalar_lea.vmem %s0, %s513
        %p515 = pneg %p60
        %p516 = pneg %p57
        %p517 = scmp.lt.s32.totalorder %s32, 1
        %s518 = scalar_select %p517, %s32, 1
        %s519 = scalar_lea.vmem %s1, %s518
        %p520 = pneg %p86
        %p521 = pneg %p83
        %p522 = scmp.lt.s32.totalorder %s32, 1
        %s523 = scalar_select %p522, %s32, 1
        %s524 = scalar_lea.vmem %s2, %s523
        %p525 = pneg %p112
        %p526 = pneg %p109
        %p527 = scmp.lt.s32.totalorder %s32, 1
        %s528 = scalar_select %p527, %s32, 1
        %s529 = smul.addr %s528, 4
        %s530 = smul.addr %s529, 4
        %s531 = scalar_lea.vmem %s3, %s530
        %p532 = pneg %p138
        %p533 = pneg %p135
        %p534 = scmp.lt.s32.totalorder %s32, 1
        %s535 = scalar_select %p534, %s32, 1
        %s536 = scalar_lea.vmem %s4, %s535
        %p537 = pneg %p164
        %p538 = pneg %p161
        %p539 = scmp.lt.s32.totalorder %s32, 1
        %s540 = scalar_select %p539, %s32, 1
        %s541 = smul.addr %s540, 4
        %s542 = smul.addr %s541, 4
        %s543 = scalar_lea.vmem %s5, %s542
        %p544 = pneg %p190
        %p545 = pneg %p187
        %p546 = scmp.lt.s32.totalorder %s32, 1
        %s547 = scalar_select %p546, %s32, 1
        %s548 = scalar_lea.vmem %s6, %s547
        %p549 = pneg %p216
        %p550 = pneg %p213
        %p551 = scmp.lt.s32.totalorder %s32, 1
        %s552 = scalar_select %p551, %s32, 1
        %s553 = scalar_lea.vmem %s7, %s552
        %p554 = pneg %p242
        %p555 = pneg %p239
        %p556 = scmp.lt.s32.totalorder %s32, 1
        %s557 = scalar_select %p556, %s32, 1
        %s558 = scalar_lea.vmem %s8, %s557
        %p559 = pneg %p268
        %p560 = pneg %p265
        %p561 = scmp.lt.s32.totalorder %s32, 1
        %s562 = scalar_select %p561, %s32, 1
        %s563 = smul.addr %s562, 4
        %s564 = smul.addr %s563, 4
        %s565 = scalar_lea.vmem %s9, %s564
        %p566 = pneg %p294
        %p567 = pneg %p291
        %p568 = scmp.lt.s32.totalorder %s32, 1
        %s569 = scalar_select %p568, %s32, 1
        %s570 = scalar_lea.vmem %s10, %s569
        %p571 = pneg %p320
        %p572 = pneg %p317
        %p573 = scmp.lt.s32.totalorder %s32, 1
        %s574 = scalar_select %p573, %s32, 1
        %s575 = smul.addr %s574, 16
        %s576 = smul.addr %s575, 4
        %s577 = scalar_lea.vmem %s11, %s576
        %p578 = pneg %p346
        %p579 = pneg %p343
        %p580 = scmp.lt.s32.totalorder %s32, 1
        %s581 = scalar_select %p580, %s32, 1
        %s582 = scalar_lea.vmem %s12, %s581
        %p583 = pneg %p372
        %p584 = pneg %p369
        %p585 = pneg %p398
        %p586 = pneg %p395
        %s587 = sand.u32 %s385, 1
        %s588 = scalar_lea.sflag [#allocation3], %s587
        %s589 = sand.u32 %s385, 1
        %s590 = smul.addr %s589, 8
        %s591 = scalar_lea.vmem [#allocation2], %s590
        %p592 = scmp.lt.s32.totalorder %s31, 1
        %s593 = scalar_select %p592, %s31, 1
        %s594 = smul.addr %s593, 8
        %s595 = scalar_lea.vmem %s0, %s594
        %p596 = scmp.lt.s32.totalorder %s32, 1
        %s597 = scalar_select %p596, %s32, 1
        %s598 = scalar_lea.vmem %s1, %s597
        %p599 = scmp.lt.s32.totalorder %s32, 1
        %s600 = scalar_select %p599, %s32, 1
        %s601 = scalar_lea.vmem %s2, %s600
        %p602 = scmp.lt.s32.totalorder %s32, 1
        %s603 = scalar_select %p602, %s32, 1
        %s604 = smul.addr %s603, 4
        %s605 = smul.addr %s604, 4
        %s606 = scalar_lea.vmem %s3, %s605
        %p607 = scmp.lt.s32.totalorder %s32, 1
        %s608 = scalar_select %p607, %s32, 1
        %s609 = scalar_lea.vmem %s4, %s608
        %p610 = scmp.lt.s32.totalorder %s32, 1
        %s611 = scalar_select %p610, %s32, 1
        %s612 = smul.addr %s611, 4
        %s613 = smul.addr %s612, 4
        %s614 = scalar_lea.vmem %s5, %s613
        %p615 = scmp.lt.s32.totalorder %s32, 1
        %s616 = scalar_select %p615, %s32, 1
        %s617 = scalar_lea.vmem %s6, %s616
        %p618 = scmp.lt.s32.totalorder %s32, 1
        %s619 = scalar_select %p618, %s32, 1
        %s620 = scalar_lea.vmem %s7, %s619
        %p621 = scmp.lt.s32.totalorder %s32, 1
        %s622 = scalar_select %p621, %s32, 1
        %s623 = scalar_lea.vmem %s8, %s622
        %p624 = scmp.lt.s32.totalorder %s32, 1
        %s625 = scalar_select %p624, %s32, 1
        %s626 = smul.addr %s625, 4
        %s627 = smul.addr %s626, 4
        %s628 = scalar_lea.vmem %s9, %s627
        %p629 = scmp.lt.s32.totalorder %s32, 1
        %s630 = scalar_select %p629, %s32, 1
        %s631 = scalar_lea.vmem %s10, %s630
        %p632 = scmp.lt.s32.totalorder %s32, 1
        %s633 = scalar_select %p632, %s32, 1
        %s634 = smul.addr %s633, 16
        %s635 = smul.addr %s634, 4
        %s636 = scalar_lea.vmem %s11, %s635
        %p637 = scmp.lt.s32.totalorder %s32, 1
        %s638 = scalar_select %p637, %s32, 1
        %s639 = scalar_lea.vmem %s12, %s638
        %p641 = scmp.eq.s32.totalorder %s32, 0
        // Predicated region
        $region73: #{tpu_custom_call.1} parent=71 // pred_check
          %p642 = pneg %p641
        $region74: #{tpu_custom_call.1} parent=71 // pred_check_branch
          %644 = sbr.rel (%p642) target = $region76
        $region75: #{tpu_custom_call.1} parent=71 // pred_region
          %v645 = vld [vmem:[%s595] sm:$0xff]
          %vm646 = vcmask 261120
          %647 = vst.msk [vmem:[%s591] sm:$0xff] %vm646, %v645
        $region76: #{tpu_custom_call.1} parent=71 // pred_fallthru
          _
        %v648 = vld [vmem:[%s591] sm:$0xff]
        %vm649 = vcmask 261120
        %v650 = vsel %vm649, %v648, 0.0
        %651 = vadd.xlane.f32.xlu0 %v650
        %v652 = vpop.xlane.xlu0 %651
        %v653 = vrcp.pop 32.0
        %v654 = vmul.f32 32.0, %v653
        %v655 = vsub.f32 1.0, %v654
        %v656 = vmul.f32 %v653, %v655
        %v657 = vadd.f32 %v653, %v656
        %vm658 = vweird.f32 %v653
        %v659 = vsel %vm658, %v653, %v657
        %v660 = vmul.f32 %v652, %v659
        %v661 = vsub.f32 %v648, %v660
        %v662 = vmul.f32 %v661, %v661
        %v663 = vsel %vm649, %v662, 0.0
        %664 = vadd.xlane.f32.xlu0 %v663
        %v665 = vpop.xlane.xlu0 %664
        %v666 = vmul.f32 %v665, %v659
        %v667 = vadd.f32 %v666, 1e-05
        %v668 = vrsqrt.pop %v667
        %v669 = vmul.f32 %v668, %v667
        %v670 = vmul.f32 %v669, %v668
        %v671 = vmul.f32 0.5, %v670
        %v672 = vsub.f32 1.5, %v671
        %v673 = vmul.f32 %v668, %v672
        %vm674 = vweird.f32 %v667
        %vm675 = vweird.f32 %v668
        %vm676 = vmor %vm674, %vm675
        %v677 = vsel %vm676, %v668, %v673
        %v678 = vmul.f32 %v661, %v677
        %v679 = vld [vmem:[%s598] sm:$0x1]
        %v681 = vperm.slane %v679, 0
        %v683 = vmul.f32 %v678, %v681
        %v684 = vld [vmem:[%s601] sm:$0x1]
        %v686 = vperm.slane %v684, 0
        %v688 = vadd.f32 %v683, %v686
        %v689 = vpack.c.bf16 %v688, %v688
        %v690 = vld [vmem:[%s606] sm:$0xf]
        %v691 = vld [vmem:[%s606 + $0x4] sm:$0xf]
        %v692 = vld [vmem:[%s606 + $0x8] sm:$0xf]
        %v693 = vld [vmem:[%s606 + $0xc] sm:$0xf]
        %v694 = vld [vmem:[%s609] sm:$0x1]
        %v696 = vperm.slane %v694, 0
        %v702 = vunpack.c.l.b16 %v690
        %v703 = vunpack.c.l.b16 %v691
        %v704 = vunpack.c.l.b16 %v692
        %v705 = vunpack.c.l.b16 %v693
        %v706 = vpack.c.b16 %v703, %v702
        %v707 = vpack.c.b16 %v705, %v704
        %v711 = vsel %vm649, %v689, 0
        %713 = vmatpush.bf16.msra.mxu0 0
        %714 = vmatpush.bf16.msra.mxu0 0
        %715 = vmatpush.bf16.msra.mxu0 0
        %716 = vmatpush.bf16.msra.mxu0 0
        %717 = vmatpush.bf16.msra.mxu0 0
        %718 = vmatpush.bf16.msra.mxu0 0
        %719 = vmatpush.bf16.msra.mxu0 %v707
        %720 = vmatpush.bf16.msra.mxu0 %v706
        %721 = vmatmul.bf16.gmra.mxu0 %v711
        %v722 = vpop.f32.mrf.mxu0
        %v723 = vadd.f32 %v696, %v722
        %v724 = vpop.f32.mrf.mxu0
        %725 = vdwg.mxu0
        %727 = vrot.lane.b32.xlu0 %v723, 120
        %v728 = vpop.permute.xlu0 %727
        %730 = vrot.lane.b32.xlu0 %v723, 112
        %v731 = vpop.permute.xlu0 %730
        %733 = vrot.lane.b32.xlu0 %v723, 104
        %v734 = vpop.permute.xlu0 %733
        %v736 = vrot.slane %v731, 4
        %vm737 = vcmask 1047556
        %v738 = vsel %vm737, %v736, %v723
        %v739 = vrot.slane %v723, 4
        %v740 = vsel %vm737, %v731, %v739
        %v742 = vunpack.c.l.s4 1983009808
        %v743 = vunpack.c.0.s8 %v742
        %v744 = vperm.slane %v738, %v743
        %v746 = vunpack.c.l.s4 1983009808
        %v747 = vunpack.c.0.s8 %v746
        %v748 = vperm.slane %v740, %v747
        %v749 = vrot.slane %v734, 4
        %v750 = vsel %vm737, %v749, %v728
        %v751 = vrot.slane %v728, 4
        %v752 = vsel %vm737, %v734, %v751
        %v754 = vunpack.c.l.s4 1983009808
        %v755 = vunpack.c.0.s8 %v754
        %v756 = vperm.slane %v750, %v755
        %v758 = vunpack.c.l.s4 1983009808
        %v759 = vunpack.c.0.s8 %v758
        %v760 = vperm.slane %v752, %v759
        %v761 = vrot.slane %v756, 4
        %v762 = vsel %vm737, %v761, %v744
        %v763 = vrot.slane %v744, 4
        %v764 = vsel %vm737, %v756, %v763
        %v766 = vunpack.c.l.s4 1934713408
        %v767 = vunpack.c.0.s8 %v766
        %v768 = vperm.slane %v762, %v767
        %v770 = vunpack.c.l.s4 1934713408
        %v771 = vunpack.c.0.s8 %v770
        %v772 = vperm.slane %v764, %v771
        %v773 = vrot.slane %v760, 4
        %v774 = vsel %vm737, %v773, %v748
        %v775 = vrot.slane %v748, 4
        %v776 = vsel %vm737, %v760, %v775
        %v778 = vunpack.c.l.s4 1934713408
        %v779 = vunpack.c.0.s8 %v778
        %v780 = vperm.slane %v774, %v779
        %v782 = vunpack.c.l.s4 1934713408
        %v783 = vunpack.c.0.s8 %v782
        %v784 = vperm.slane %v776, %v783
        %v785 = vrot.slane %v768, 4
        %v786 = vsel %vm737, 0.0, %v785
        %v787 = vrot.slane %v772, 4
        %v788 = vsel %vm737, 0.0, %v787
        %v789 = vrot.slane %v780, 4
        %v790 = vsel %vm737, 0.0, %v789
        %v791 = vrot.slane %v784, 4
        %v792 = vsel %vm737, 0.0, %v791
        %v793 = vsel %vm737, %v787, %v768
        %v795 = vunpack.c.l.s4 1983009808
        %v796 = vunpack.c.0.s8 %v795
        %v797 = vperm.slane %v793, %v796
        %v798 = vrot.slane %v788, 4
        %v799 = vsel %vm737, %v798, %v786
        %v801 = vunpack.c.l.s4 1983009808
        %v802 = vunpack.c.0.s8 %v801
        %v803 = vperm.slane %v799, %v802
        %v804 = vsel %vm737, %v791, %v780
        %v806 = vunpack.c.l.s4 1983009808
        %v807 = vunpack.c.0.s8 %v806
        %v808 = vperm.slane %v804, %v807
        %v809 = vrot.slane %v792, 4
        %v810 = vsel %vm737, %v809, %v790
        %v812 = vunpack.c.l.s4 1983009808
        %v813 = vunpack.c.0.s8 %v812
        %v814 = vperm.slane %v810, %v813
        %v815 = vrot.slane %v803, 4
        %v816 = vsel %vm737, %v815, %v797
        %v817 = vrot.slane %v797, 4
        %v818 = vsel %vm737, %v803, %v817
        %v820 = vunpack.c.l.s4 1934713408
        %v821 = vunpack.c.0.s8 %v820
        %v822 = vperm.slane %v816, %v821
        %v824 = vunpack.c.l.s4 1934713408
        %v825 = vunpack.c.0.s8 %v824
        %v826 = vperm.slane %v818, %v825
        %v827 = vrot.slane %v814, 4
        %v828 = vsel %vm737, %v827, %v808
        %v829 = vrot.slane %v808, 4
        %v830 = vsel %vm737, %v814, %v829
        %v832 = vunpack.c.l.s4 1934713408
        %v833 = vunpack.c.0.s8 %v832
        %v834 = vperm.slane %v828, %v833
        %v836 = vunpack.c.l.s4 1934713408
        %v837 = vunpack.c.0.s8 %v836
        %v838 = vperm.slane %v830, %v837
        %v839 = vrot.slane %v834, 4
        %v840 = vsel %vm737, %v839, %v822
        %v841 = vrot.slane %v822, 4
        %v842 = vsel %vm737, %v834, %v841
        %v843 = vrot.slane %v838, 4
        %v844 = vsel %vm737, %v843, %v826
        %v845 = vrot.slane %v826, 4
        %v846 = vsel %vm737, %v838, %v845
        %v847 = vpack.c.bf16 %v840, %v840
        %v848 = vpack.c.bf16 %v842, %v842
        %v849 = vpack.c.bf16 %v844, %v844
        %v850 = vpack.c.bf16 %v846, %v846
        %851 = vrot.lane.b32.xlu0 %v723, 96
        %v852 = vpop.permute.xlu0 %851
        %853 = vrot.lane.b32.xlu0 %v728, 96
        %v854 = vpop.permute.xlu0 %853
        %855 = vrot.lane.b32.xlu0 %v731, 96
        %v856 = vpop.permute.xlu0 %855
        %857 = vrot.lane.b32.xlu0 %v734, 96
        %v858 = vpop.permute.xlu0 %857
        %v863 = vrot.slane %v856, 4
        %v864 = vsel %vm737, %v863, %v852
        %v865 = vrot.slane %v852, 4
        %v866 = vsel %vm737, %v856, %v865
        %v868 = vunpack.c.l.s4 1983009808
        %v869 = vunpack.c.0.s8 %v868
        %v870 = vperm.slane %v864, %v869
        %v872 = vunpack.c.l.s4 1983009808
        %v873 = vunpack.c.0.s8 %v872
        %v874 = vperm.slane %v866, %v873
        %v875 = vrot.slane %v858, 4
        %v876 = vsel %vm737, %v875, %v854
        %v877 = vrot.slane %v854, 4
        %v878 = vsel %vm737, %v858, %v877
        %v880 = vunpack.c.l.s4 1983009808
        %v881 = vunpack.c.0.s8 %v880
        %v882 = vperm.slane %v876, %v881
        %v884 = vunpack.c.l.s4 1983009808
        %v885 = vunpack.c.0.s8 %v884
        %v886 = vperm.slane %v878, %v885
        %v887 = vrot.slane %v882, 4
        %v888 = vsel %vm737, %v887, %v870
        %v889 = vrot.slane %v870, 4
        %v890 = vsel %vm737, %v882, %v889
        %v892 = vunpack.c.l.s4 1934713408
        %v893 = vunpack.c.0.s8 %v892
        %v894 = vperm.slane %v888, %v893
        %v896 = vunpack.c.l.s4 1934713408
        %v897 = vunpack.c.0.s8 %v896
        %v898 = vperm.slane %v890, %v897
        %v899 = vrot.slane %v886, 4
        %v900 = vsel %vm737, %v899, %v874
        %v901 = vrot.slane %v874, 4
        %v902 = vsel %vm737, %v886, %v901
        %v904 = vunpack.c.l.s4 1934713408
        %v905 = vunpack.c.0.s8 %v904
        %v906 = vperm.slane %v900, %v905
        %v908 = vunpack.c.l.s4 1934713408
        %v909 = vunpack.c.0.s8 %v908
        %v910 = vperm.slane %v902, %v909
        %v911 = vrot.slane %v894, 4
        %v912 = vsel %vm737, 0.0, %v911
        %v913 = vrot.slane %v898, 4
        %v914 = vsel %vm737, 0.0, %v913
        %v915 = vrot.slane %v906, 4
        %v916 = vsel %vm737, 0.0, %v915
        %v917 = vrot.slane %v910, 4
        %v918 = vsel %vm737, 0.0, %v917
        %v919 = vsel %vm737, %v913, %v894
        %v921 = vunpack.c.l.s4 1983009808
        %v922 = vunpack.c.0.s8 %v921
        %v923 = vperm.slane %v919, %v922
        %v924 = vrot.slane %v914, 4
        %v925 = vsel %vm737, %v924, %v912
        %v927 = vunpack.c.l.s4 1983009808
        %v928 = vunpack.c.0.s8 %v927
        %v929 = vperm.slane %v925, %v928
        %v930 = vsel %vm737, %v917, %v906
        %v932 = vunpack.c.l.s4 1983009808
        %v933 = vunpack.c.0.s8 %v932
        %v934 = vperm.slane %v930, %v933
        %v935 = vrot.slane %v918, 4
        %v936 = vsel %vm737, %v935, %v916
        %v938 = vunpack.c.l.s4 1983009808
        %v939 = vunpack.c.0.s8 %v938
        %v940 = vperm.slane %v936, %v939
        %v941 = vrot.slane %v929, 4
        %v942 = vsel %vm737, %v941, %v923
        %v943 = vrot.slane %v923, 4
        %v944 = vsel %vm737, %v929, %v943
        %v946 = vunpack.c.l.s4 1934713408
        %v947 = vunpack.c.0.s8 %v946
        %v948 = vperm.slane %v942, %v947
        %v950 = vunpack.c.l.s4 1934713408
        %v951 = vunpack.c.0.s8 %v950
        %v952 = vperm.slane %v944, %v951
        %v953 = vrot.slane %v940, 4
        %v954 = vsel %vm737, %v953, %v934
        %v955 = vrot.slane %v934, 4
        %v956 = vsel %vm737, %v940, %v955
        %v958 = vunpack.c.l.s4 1934713408
        %v959 = vunpack.c.0.s8 %v958
        %v960 = vperm.slane %v954, %v959
        %v962 = vunpack.c.l.s4 1934713408
        %v963 = vunpack.c.0.s8 %v962
        %v964 = vperm.slane %v956, %v963
        %v965 = vrot.slane %v960, 4
        %v966 = vsel %vm737, %v965, %v948
        %v967 = vrot.slane %v948, 4
        %v968 = vsel %vm737, %v960, %v967
        %v969 = vrot.slane %v964, 4
        %v970 = vsel %vm737, %v969, %v952
        %v971 = vrot.slane %v952, 4
        %v972 = vsel %vm737, %v964, %v971
        %v973 = vpack.c.bf16 %v966, %v966
        %v974 = vpack.c.bf16 %v968, %v968
        %v975 = vpack.c.bf16 %v970, %v970
        %v976 = vpack.c.bf16 %v972, %v972
        %977 = vrot.lane.b32.xlu0 %v723, 64
        %v978 = vpop.permute.xlu0 %977
        %979 = vrot.lane.b32.xlu0 %v728, 64
        %v980 = vpop.permute.xlu0 %979
        %981 = vrot.lane.b32.xlu0 %v731, 64
        %v982 = vpop.permute.xlu0 %981
        %983 = vrot.lane.b32.xlu0 %v734, 64
        %v984 = vpop.permute.xlu0 %983
        %v989 = vrot.slane %v982, 4
        %v990 = vsel %vm737, %v989, %v978
        %v991 = vrot.slane %v978, 4
        %v992 = vsel %vm737, %v982, %v991
        %v994 = vunpack.c.l.s4 1983009808
        %v995 = vunpack.c.0.s8 %v994
        %v996 = vperm.slane %v990, %v995
        %v998 = vunpack.c.l.s4 1983009808
        %v999 = vunpack.c.0.s8 %v998
        %v1000 = vperm.slane %v992, %v999
        %v1001 = vrot.slane %v984, 4
        %v1002 = vsel %vm737, %v1001, %v980
        %v1003 = vrot.slane %v980, 4
        %v1004 = vsel %vm737, %v984, %v1003
        %v1006 = vunpack.c.l.s4 1983009808
        %v1007 = vunpack.c.0.s8 %v1006
        %v1008 = vperm.slane %v1002, %v1007
        %v1010 = vunpack.c.l.s4 1983009808
        %v1011 = vunpack.c.0.s8 %v1010
        %v1012 = vperm.slane %v1004, %v1011
        %v1013 = vrot.slane %v1008, 4
        %v1014 = vsel %vm737, %v1013, %v996
        %v1015 = vrot.slane %v996, 4
        %v1016 = vsel %vm737, %v1008, %v1015
        %v1018 = vunpack.c.l.s4 1934713408
        %v1019 = vunpack.c.0.s8 %v1018
        %v1020 = vperm.slane %v1014, %v1019
        %v1022 = vunpack.c.l.s4 1934713408
        %v1023 = vunpack.c.0.s8 %v1022
        %v1024 = vperm.slane %v1016, %v1023
        %v1025 = vrot.slane %v1012, 4
        %v1026 = vsel %vm737, %v1025, %v1000
        %v1027 = vrot.slane %v1000, 4
        %v1028 = vsel %vm737, %v1012, %v1027
        %v1030 = vunpack.c.l.s4 1934713408
        %v1031 = vunpack.c.0.s8 %v1030
        %v1032 = vperm.slane %v1026, %v1031
        %v1034 = vunpack.c.l.s4 1934713408
        %v1035 = vunpack.c.0.s8 %v1034
        %v1036 = vperm.slane %v1028, %v1035
        %v1037 = vrot.slane %v1020, 4
        %v1038 = vsel %vm737, 0.0, %v1037
        %v1039 = vrot.slane %v1024, 4
        %v1040 = vsel %vm737, 0.0, %v1039
        %v1041 = vrot.slane %v1032, 4
        %v1042 = vsel %vm737, 0.0, %v1041
        %v1043 = vrot.slane %v1036, 4
        %v1044 = vsel %vm737, 0.0, %v1043
        %v1045 = vsel %vm737, %v1039, %v1020
        %v1047 = vunpack.c.l.s4 1983009808
        %v1048 = vunpack.c.0.s8 %v1047
        %v1049 = vperm.slane %v1045, %v1048
        %v1050 = vrot.slane %v1040, 4
        %v1051 = vsel %vm737, %v1050, %v1038
        %v1053 = vunpack.c.l.s4 1983009808
        %v1054 = vunpack.c.0.s8 %v1053
        %v1055 = vperm.slane %v1051, %v1054
        %v1056 = vsel %vm737, %v1043, %v1032
        %v1058 = vunpack.c.l.s4 1983009808
        %v1059 = vunpack.c.0.s8 %v1058
        %v1060 = vperm.slane %v1056, %v1059
        %v1061 = vrot.slane %v1044, 4
        %v1062 = vsel %vm737, %v1061, %v1042
        %v1064 = vunpack.c.l.s4 1983009808
        %v1065 = vunpack.c.0.s8 %v1064
        %v1066 = vperm.slane %v1062, %v1065
        %v1067 = vrot.slane %v1055, 4
        %v1068 = vsel %vm737, %v1067, %v1049
        %v1069 = vrot.slane %v1049, 4
        %v1070 = vsel %vm737, %v1055, %v1069
        %v1072 = vunpack.c.l.s4 1934713408
        %v1073 = vunpack.c.0.s8 %v1072
        %v1074 = vperm.slane %v1068, %v1073
        %v1076 = vunpack.c.l.s4 1934713408
        %v1077 = vunpack.c.0.s8 %v1076
        %v1078 = vperm.slane %v1070, %v1077
        %v1079 = vrot.slane %v1066, 4
        %v1080 = vsel %vm737, %v1079, %v1060
        %v1081 = vrot.slane %v1060, 4
        %v1082 = vsel %vm737, %v1066, %v1081
        %v1084 = vunpack.c.l.s4 1934713408
        %v1085 = vunpack.c.0.s8 %v1084
        %v1086 = vperm.slane %v1080, %v1085
        %v1088 = vunpack.c.l.s4 1934713408
        %v1089 = vunpack.c.0.s8 %v1088
        %v1090 = vperm.slane %v1082, %v1089
        %v1091 = vrot.slane %v1086, 4
        %v1092 = vsel %vm737, %v1091, %v1074
        %v1093 = vrot.slane %v1074, 4
        %v1094 = vsel %vm737, %v1086, %v1093
        %v1095 = vrot.slane %v1090, 4
        %v1096 = vsel %vm737, %v1095, %v1078
        %v1097 = vrot.slane %v1078, 4
        %v1098 = vsel %vm737, %v1090, %v1097
        %v1099 = vpack.c.bf16 %v1092, %v1092
        %v1100 = vpack.c.bf16 %v1094, %v1094
        %v1101 = vpack.c.bf16 %v1096, %v1096
        %v1102 = vpack.c.bf16 %v1098, %v1098
        %vm1103 = vcmask 64512
        %v1105 = vsel %vm1103, %v847, 0
        %v1108 = vsel %vm1103, %v973, 0
        %1110 = vmatpush.bf16.xpose.msra.mxu0 0
        %1111 = vmatpush.bf16.xpose.msra.mxu0 0
        %1112 = vmatpush.bf16.xpose.msra.mxu0 0
        %1113 = vmatpush.bf16.xpose.msra.mxu0 0
        %1114 = vmatpush.bf16.xpose.msra.mxu0 0
        %1115 = vmatpush.bf16.xpose.msra.mxu0 0
        %1116 = vmatpush.bf16.xpose.msra.mxu0 0
        %1117 = vmatpush.bf16.xpose.msra.mxu0 %v1108
        %1118 = vmatmul.bf16.gmra.mxu0 %v1105
        %v1119 = vpop.f32.mrf.mxu0
        %v1120 = vadd.f32 0.0, %v1119
        %v1121 = vpop.f32.mrf.mxu0
        %1122 = vdwg.mxu0
        %v1124 = vsel %vm1103, %v848, 0
        %v1127 = vsel %vm1103, %v974, 0
        %1129 = vmatpush.bf16.xpose.msra.mxu0 0
        %1130 = vmatpush.bf16.xpose.msra.mxu0 0
        %1131 = vmatpush.bf16.xpose.msra.mxu0 0
        %1132 = vmatpush.bf16.xpose.msra.mxu0 0
        %1133 = vmatpush.bf16.xpose.msra.mxu0 0
        %1134 = vmatpush.bf16.xpose.msra.mxu0 0
        %1135 = vmatpush.bf16.xpose.msra.mxu0 0
        %1136 = vmatpush.bf16.xpose.msra.mxu0 %v1127
        %1137 = vmatmul.bf16.gmra.mxu0 %v1124
        %v1138 = vpop.f32.mrf.mxu0
        %v1139 = vadd.f32 0.0, %v1138
        %v1140 = vpop.f32.mrf.mxu0
        %1141 = vdwg.mxu0
        %v1143 = vsel %vm1103, %v849, 0
        %v1146 = vsel %vm1103, %v975, 0
        %1148 = vmatpush.bf16.xpose.msra.mxu0 0
        %1149 = vmatpush.bf16.xpose.msra.mxu0 0
        %1150 = vmatpush.bf16.xpose.msra.mxu0 0
        %1151 = vmatpush.bf16.xpose.msra.mxu0 0
        %1152 = vmatpush.bf16.xpose.msra.mxu0 0
        %1153 = vmatpush.bf16.xpose.msra.mxu0 0
        %1154 = vmatpush.bf16.xpose.msra.mxu0 0
        %1155 = vmatpush.bf16.xpose.msra.mxu0 %v1146
        %1156 = vmatmul.bf16.gmra.mxu0 %v1143
        %v1157 = vpop.f32.mrf.mxu0
        %v1158 = vadd.f32 0.0, %v1157
        %v1159 = vpop.f32.mrf.mxu0
        %1160 = vdwg.mxu0
        %v1162 = vsel %vm1103, %v850, 0
        %v1165 = vsel %vm1103, %v976, 0
        %1167 = vmatpush.bf16.xpose.msra.mxu0 0
        %1168 = vmatpush.bf16.xpose.msra.mxu0 0
        %1169 = vmatpush.bf16.xpose.msra.mxu0 0
        %1170 = vmatpush.bf16.xpose.msra.mxu0 0
        %1171 = vmatpush.bf16.xpose.msra.mxu0 0
        %1172 = vmatpush.bf16.xpose.msra.mxu0 0
        %1173 = vmatpush.bf16.xpose.msra.mxu0 0
        %1174 = vmatpush.bf16.xpose.msra.mxu0 %v1165
        %1175 = vmatmul.bf16.gmra.mxu0 %v1162
        %v1176 = vpop.f32.mrf.mxu0
        %v1177 = vadd.f32 0.0, %v1176
        %v1178 = vpop.f32.mrf.mxu0
        %1179 = vdwg.mxu0
        %v1180 = vsel %vm1103, %v1120, -inf
        %1181 = vmax.xlane.f32.xlu0 %v1180
        %v1182 = vpop.xlane.xlu0 %1181
        %v1183 = vsel %vm1103, %v1139, -inf
        %1184 = vmax.xlane.f32.xlu0 %v1183
        %v1185 = vpop.xlane.xlu0 %1184
        %v1186 = vsel %vm1103, %v1158, -inf
        %1187 = vmax.xlane.f32.xlu0 %v1186
        %v1188 = vpop.xlane.xlu0 %1187
        %v1189 = vsel %vm1103, %v1177, -inf
        %1190 = vmax.xlane.f32.xlu0 %v1189
        %v1191 = vpop.xlane.xlu0 %1190
        %v1192 = vsub.f32 %v1120, %v1182
        %v1193 = vsub.f32 %v1139, %v1185
        %v1194 = vsub.f32 %v1158, %v1188
        %v1195 = vsub.f32 %v1177, %v1191
        %v1196 = vmul.f32 %v1192, 1.442695
        %v1197 = vpow.pop %v1196
        %v1198 = vmul.f32 %v1193, 1.442695
        %v1199 = vpow.pop %v1198
        %v1200 = vmul.f32 %v1194, 1.442695
        %v1201 = vpow.pop %v1200
        %v1202 = vmul.f32 %v1195, 1.442695
        %v1203 = vpow.pop %v1202
        %v1204 = vsel %vm1103, %v1197, 0.0
        %1205 = vadd.xlane.f32.xlu0 %v1204
        %v1206 = vpop.xlane.xlu0 %1205
        %v1207 = vsel %vm1103, %v1199, 0.0
        %1208 = vadd.xlane.f32.xlu0 %v1207
        %v1209 = vpop.xlane.xlu0 %1208
        %v1210 = vsel %vm1103, %v1201, 0.0
        %1211 = vadd.xlane.f32.xlu0 %v1210
        %v1212 = vpop.xlane.xlu0 %1211
        %v1213 = vsel %vm1103, %v1203, 0.0
        %1214 = vadd.xlane.f32.xlu0 %v1213
        %v1215 = vpop.xlane.xlu0 %1214
        %v1216 = vrcp.pop %v1206
        %v1217 = vrcp.pop %v1209
        %v1218 = vrcp.pop %v1212
        %v1219 = vrcp.pop %v1215
        %v1220 = vpack.c.bf16 %v1197, %v1197
        %v1221 = vpack.c.bf16 %v1199, %v1199
        %v1222 = vpack.c.bf16 %v1201, %v1201
        %v1223 = vpack.c.bf16 %v1203, %v1203
        %v1225 = vsel %vm1103, %v1220, 0
        %vm1227 = vcmask 1043456
        %v1229 = vsel %vm1227, %v1099, 0
        %1231 = vmatpush.bf16.msra.mxu0 0
        %1232 = vmatpush.bf16.msra.mxu0 0
        %1233 = vmatpush.bf16.msra.mxu0 0
        %1234 = vmatpush.bf16.msra.mxu0 0
        %1235 = vmatpush.bf16.msra.mxu0 0
        %1236 = vmatpush.bf16.msra.mxu0 0
        %1237 = vmatpush.bf16.msra.mxu0 0
        %1238 = vmatpush.bf16.msra.mxu0 %v1229
        %1239 = vmatmul.bf16.gmra.mxu0 %v1225
        %v1240 = vpop.f32.mrf.mxu0
        %v1241 = vadd.f32 0.0, %v1240
        %v1242 = vpop.f32.mrf.mxu0
        %1243 = vdwg.mxu0
        %v1245 = vsel %vm1103, %v1221, 0
        %v1248 = vsel %vm1227, %v1100, 0
        %1250 = vmatpush.bf16.msra.mxu0 0
        %1251 = vmatpush.bf16.msra.mxu0 0
        %1252 = vmatpush.bf16.msra.mxu0 0
        %1253 = vmatpush.bf16.msra.mxu0 0
        %1254 = vmatpush.bf16.msra.mxu0 0
        %1255 = vmatpush.bf16.msra.mxu0 0
        %1256 = vmatpush.bf16.msra.mxu0 0
        %1257 = vmatpush.bf16.msra.mxu0 %v1248
        %1258 = vmatmul.bf16.gmra.mxu0 %v1245
        %v1259 = vpop.f32.mrf.mxu0
        %v1260 = vadd.f32 0.0, %v1259
        %v1261 = vpop.f32.mrf.mxu0
        %1262 = vdwg.mxu0
        %v1264 = vsel %vm1103, %v1222, 0
        %v1267 = vsel %vm1227, %v1101, 0
        %1269 = vmatpush.bf16.msra.mxu0 0
        %1270 = vmatpush.bf16.msra.mxu0 0
        %1271 = vmatpush.bf16.msra.mxu0 0
        %1272 = vmatpush.bf16.msra.mxu0 0
        %1273 = vmatpush.bf16.msra.mxu0 0
        %1274 = vmatpush.bf16.msra.mxu0 0
        %1275 = vmatpush.bf16.msra.mxu0 0
        %1276 = vmatpush.bf16.msra.mxu0 %v1267
        %1277 = vmatmul.bf16.gmra.mxu0 %v1264
        %v1278 = vpop.f32.mrf.mxu0
        %v1279 = vadd.f32 0.0, %v1278
        %v1280 = vpop.f32.mrf.mxu0
        %1281 = vdwg.mxu0
        %v1283 = vsel %vm1103, %v1223, 0
        %v1286 = vsel %vm1227, %v1102, 0
        %1288 = vmatpush.bf16.msra.mxu0 0
        %1289 = vmatpush.bf16.msra.mxu0 0
        %1290 = vmatpush.bf16.msra.mxu0 0
        %1291 = vmatpush.bf16.msra.mxu0 0
        %1292 = vmatpush.bf16.msra.mxu0 0
        %1293 = vmatpush.bf16.msra.mxu0 0
        %1294 = vmatpush.bf16.msra.mxu0 0
        %1295 = vmatpush.bf16.msra.mxu0 %v1286
        %1296 = vmatmul.bf16.gmra.mxu0 %v1283
        %v1297 = vpop.f32.mrf.mxu0
        %v1298 = vadd.f32 0.0, %v1297
        %v1299 = vpop.f32.mrf.mxu0
        %1300 = vdwg.mxu0
        %v1301 = vmul.f32 %v1241, %v1216
        %v1302 = vmul.f32 %v1260, %v1217
        %v1303 = vmul.f32 %v1279, %v1218
        %v1304 = vmul.f32 %v1298, %v1219
        %v1305 = vrot.slane %v1303, 4
        %v1306 = vsel %vm737, %v1305, %v1301
        %v1307 = vrot.slane %v1301, 4
        %v1308 = vsel %vm737, %v1303, %v1307
        %v1310 = vunpack.c.l.s4 1983009808
        %v1311 = vunpack.c.0.s8 %v1310
        %v1312 = vperm.slane %v1306, %v1311
        %v1314 = vunpack.c.l.s4 1983009808
        %v1315 = vunpack.c.0.s8 %v1314
        %v1316 = vperm.slane %v1308, %v1315
        %v1317 = vrot.slane %v1304, 4
        %v1318 = vsel %vm737, %v1317, %v1302
        %v1319 = vrot.slane %v1302, 4
        %v1320 = vsel %vm737, %v1304, %v1319
        %v1322 = vunpack.c.l.s4 1983009808
        %v1323 = vunpack.c.0.s8 %v1322
        %v1324 = vperm.slane %v1318, %v1323
        %v1326 = vunpack.c.l.s4 1983009808
        %v1327 = vunpack.c.0.s8 %v1326
        %v1328 = vperm.slane %v1320, %v1327
        %v1329 = vrot.slane %v1324, 4
        %v1330 = vsel %vm737, %v1329, %v1312
        %v1331 = vrot.slane %v1312, 4
        %v1332 = vsel %vm737, %v1324, %v1331
        %v1334 = vunpack.c.l.s4 1934713408
        %v1335 = vunpack.c.0.s8 %v1334
        %v1336 = vperm.slane %v1330, %v1335
        %v1338 = vunpack.c.l.s4 1934713408
        %v1339 = vunpack.c.0.s8 %v1338
        %v1340 = vperm.slane %v1332, %v1339
        %v1341 = vrot.slane %v1328, 4
        %v1342 = vsel %vm737, %v1341, %v1316
        %v1343 = vrot.slane %v1316, 4
        %v1344 = vsel %vm737, %v1328, %v1343
        %v1346 = vunpack.c.l.s4 1934713408
        %v1347 = vunpack.c.0.s8 %v1346
        %v1348 = vperm.slane %v1342, %v1347
        %v1350 = vunpack.c.l.s4 1934713408
        %v1351 = vunpack.c.0.s8 %v1350
        %v1352 = vperm.slane %v1344, %v1351
        %v1353 = vrot.slane %v1336, 4
        %v1354 = vsel %vm737, 0.0, %v1353
        %v1355 = vrot.slane %v1340, 4
        %v1356 = vsel %vm737, 0.0, %v1355
        %v1357 = vrot.slane %v1348, 4
        %v1358 = vsel %vm737, 0.0, %v1357
        %v1359 = vrot.slane %v1352, 4
        %v1360 = vsel %vm737, 0.0, %v1359
        %v1361 = vsel %vm737, %v1355, %v1336
        %v1363 = vunpack.c.l.s4 1983009808
        %v1364 = vunpack.c.0.s8 %v1363
        %v1365 = vperm.slane %v1361, %v1364
        %v1366 = vrot.slane %v1356, 4
        %v1367 = vsel %vm737, %v1366, %v1354
        %v1369 = vunpack.c.l.s4 1983009808
        %v1370 = vunpack.c.0.s8 %v1369
        %v1371 = vperm.slane %v1367, %v1370
        %v1372 = vsel %vm737, %v1359, %v1348
        %v1374 = vunpack.c.l.s4 1983009808
        %v1375 = vunpack.c.0.s8 %v1374
        %v1376 = vperm.slane %v1372, %v1375
        %v1377 = vrot.slane %v1360, 4
        %v1378 = vsel %vm737, %v1377, %v1358
        %v1380 = vunpack.c.l.s4 1983009808
        %v1381 = vunpack.c.0.s8 %v1380
        %v1382 = vperm.slane %v1378, %v1381
        %v1383 = vrot.slane %v1371, 4
        %v1384 = vsel %vm737, %v1383, %v1365
        %v1385 = vrot.slane %v1365, 4
        %v1386 = vsel %vm737, %v1371, %v1385
        %v1388 = vunpack.c.l.s4 1934713408
        %v1389 = vunpack.c.0.s8 %v1388
        %v1390 = vperm.slane %v1384, %v1389
        %v1392 = vunpack.c.l.s4 1934713408
        %v1393 = vunpack.c.0.s8 %v1392
        %v1394 = vperm.slane %v1386, %v1393
        %v1395 = vrot.slane %v1382, 4
        %v1396 = vsel %vm737, %v1395, %v1376
        %v1397 = vrot.slane %v1376, 4
        %v1398 = vsel %vm737, %v1382, %v1397
        %v1400 = vunpack.c.l.s4 1934713408
        %v1401 = vunpack.c.0.s8 %v1400
        %v1402 = vperm.slane %v1396, %v1401
        %v1404 = vunpack.c.l.s4 1934713408
        %v1405 = vunpack.c.0.s8 %v1404
        %v1406 = vperm.slane %v1398, %v1405
        %v1407 = vrot.slane %v1402, 4
        %v1408 = vsel %vm737, %v1407, %v1390
        %v1409 = vrot.slane %v1390, 4
        %v1410 = vsel %vm737, %v1402, %v1409
        %v1411 = vrot.slane %v1406, 4
        %v1412 = vsel %vm737, %v1411, %v1394
        %v1413 = vrot.slane %v1394, 4
        %v1414 = vsel %vm737, %v1406, %v1413
        %1416 = vrot.lane.b32.xlu0 %v1410, 8
        %v1417 = vpop.permute.xlu0 %1416
        %1420 = vrot.lane.b32.xlu0 %v1412, 16
        %v1421 = vpop.permute.xlu0 %1420
        %1424 = vrot.lane.b32.xlu0 %v1414, 24
        %v1425 = vpop.permute.xlu0 %1424
        %v1427 = vsel %vm1103, %v1408, %v1417
        %vm1428 = vcmask 130048
        %v1429 = vsel %vm1428, %v1427, %v1421
        %vm1430 = vcmask 195584
        %v1431 = vsel %vm1430, %v1429, %v1425
        %v1432 = vpack.c.bf16 %v1431, %v1431
        %v1433 = vld [vmem:[%s614] sm:$0xf]
        %v1434 = vld [vmem:[%s614 + $0x4] sm:$0xf]
        %v1435 = vld [vmem:[%s614 + $0x8] sm:$0xf]
        %v1436 = vld [vmem:[%s614 + $0xc] sm:$0xf]
        %v1437 = vld [vmem:[%s617] sm:$0x1]
        %v1439 = vperm.slane %v1437, 0
        %v1445 = vunpack.c.l.b16 %v1433
        %v1446 = vunpack.c.l.b16 %v1434
        %v1447 = vunpack.c.l.b16 %v1435
        %v1448 = vunpack.c.l.b16 %v1436
        %v1449 = vpack.c.b16 %v1446, %v1445
        %v1450 = vpack.c.b16 %v1448, %v1447
        %v1454 = vsel %vm649, %v1432, 0
        %1456 = vmatpush.bf16.msra.mxu0 0
        %1457 = vmatpush.bf16.msra.mxu0 0
        %1458 = vmatpush.bf16.msra.mxu0 0
        %1459 = vmatpush.bf16.msra.mxu0 0
        %1460 = vmatpush.bf16.msra.mxu0 0
        %1461 = vmatpush.bf16.msra.mxu0 0
        %1462 = vmatpush.bf16.msra.mxu0 %v1450
        %1463 = vmatpush.bf16.msra.mxu0 %v1449
        %1464 = vmatmul.bf16.gmra.mxu0 %v1454
        %v1465 = vpop.f32.mrf.mxu0
        %v1466 = vadd.f32 %v1439, %v1465
        %v1467 = vpop.f32.mrf.mxu0
        %1468 = vdwg.mxu0
        %v1469 = vadd.f32 %v648, %v1466
        %v1470 = vsel %vm649, %v1469, 0.0
        %1471 = vadd.xlane.f32.xlu0 %v1470
        %v1472 = vpop.xlane.xlu0 %1471
        %v1473 = vmul.f32 %v1472, %v659
        %v1474 = vsub.f32 %v1469, %v1473
        %v1475 = vmul.f32 %v1474, %v1474
        %v1476 = vsel %vm649, %v1475, 0.0
        %1477 = vadd.xlane.f32.xlu0 %v1476
        %v1478 = vpop.xlane.xlu0 %1477
        %v1479 = vmul.f32 %v1478, %v659
        %v1480 = vadd.f32 %v1479, 1e-05
        %v1481 = vrsqrt.pop %v1480
        %v1482 = vmul.f32 %v1481, %v1480
        %v1483 = vmul.f32 %v1482, %v1481
        %v1484 = vmul.f32 0.5, %v1483
        %v1485 = vsub.f32 1.5, %v1484
        %v1486 = vmul.f32 %v1481, %v1485
        %vm1487 = vweird.f32 %v1480
        %vm1488 = vweird.f32 %v1481
        %vm1489 = vmor %vm1487, %vm1488
        %v1490 = vsel %vm1489, %v1481, %v1486
        %v1491 = vmul.f32 %v1474, %v1490
        %v1492 = vld [vmem:[%s620] sm:$0x1]
        %v1494 = vperm.slane %v1492, 0
        %v1496 = vmul.f32 %v1491, %v1494
        %v1497 = vld [vmem:[%s623] sm:$0x1]
        %v1499 = vperm.slane %v1497, 0
        %v1501 = vadd.f32 %v1496, %v1499
        %v1502 = vpack.c.bf16 %v1501, %v1501
        %v1503 = vld [vmem:[%s639] sm:$0x1]
        %v1505 = vperm.slane %v1503, 0
        %v1507 = vadd.f32 %v1469, %v1505
        %v1508 = vld [vmem:[%s628] sm:$0xf]
        %v1509 = vld [vmem:[%s628 + $0x4] sm:$0xf]
        %v1510 = vld [vmem:[%s628 + $0x8] sm:$0xf]
        %v1511 = vld [vmem:[%s628 + $0xc] sm:$0xf]
        %v1512 = vld [vmem:[%s631] sm:$0x1]
        %v1514 = vperm.slane %v1512, 0
        %v1520 = vunpack.c.l.b16 %v1508
        %v1521 = vunpack.c.l.b16 %v1509
        %v1522 = vunpack.c.l.b16 %v1510
        %v1523 = vunpack.c.l.b16 %v1511
        %v1524 = vpack.c.b16 %v1521, %v1520
        %v1525 = vpack.c.b16 %v1523, %v1522
        %v1529 = vsel %vm649, %v1502, 0
        %1531 = vmatpush.bf16.msra.mxu0 0
        %1532 = vmatpush.bf16.msra.mxu0 0
        %1533 = vmatpush.bf16.msra.mxu0 0
        %1534 = vmatpush.bf16.msra.mxu0 0
        %1535 = vmatpush.bf16.msra.mxu0 0
        %1536 = vmatpush.bf16.msra.mxu0 0
        %1537 = vmatpush.bf16.msra.mxu0 %v1525
        %1538 = vmatpush.bf16.msra.mxu0 %v1524
        %1539 = vmatmul.bf16.gmra.mxu0 %v1529
        %v1540 = vpop.f32.mrf.mxu0
        %v1541 = vadd.f32 %v1514, %v1540
        %v1542 = vpop.f32.mrf.mxu0
        %1543 = vdwg.mxu0
        %v1544 = vmul.f32 %v1541, 1.702
        %v1545 = vxor.u32 %v1544, 2147483648
        %v1546 = vmul.f32 %v1545, 1.442695
        %v1547 = vpow.pop %v1546
        %v1548 = vadd.f32 %v1547, 1.0
        %v1549 = vrcp.pop %v1548
        %v1550 = vmul.f32 %v1548, %v1549
        %v1551 = vsub.f32 1.0, %v1550
        %v1552 = vmul.f32 %v1549, %v1551
        %v1553 = vadd.f32 %v1549, %v1552
        %vm1554 = vweird.f32 %v1548
        %vm1555 = vweird.f32 %v1549
        %vm1556 = vmor %vm1554, %vm1555
        %v1557 = vsel %vm1556, %v1549, %v1553
        %v1558 = vand.u32 2147483647, %v1548
        %vm1559 = vcmp.eq.f32.partialorder %v1558, 8.507059e+37
        %v1560 = vand.u32 %v1548, 2147483648
        %v1561 = vor.u32 1.1754944e-38, %v1560
        %v1562 = vsel %vm1559, %v1561, %v1557
        %v1563 = vmul.f32 1.0, %v1562
        %v1564 = vmul.f32 %v1541, %v1563
        %v1565 = vpack.c.bf16 %v1564, %v1564
        %v1566 = vld [vmem:[%s636] sm:$0xf]
        %v1567 = vld [vmem:[%s636 + $0x4] sm:$0xf]
        %v1568 = vld [vmem:[%s636 + $0x8] sm:$0xf]
        %v1569 = vld [vmem:[%s636 + $0xc] sm:$0xf]
        %v1570 = vld [vmem:[%s636 + $0x10] sm:$0xf]
        %v1571 = vld [vmem:[%s636 + $0x14] sm:$0xf]
        %v1572 = vld [vmem:[%s636 + $0x18] sm:$0xf]
        %v1573 = vld [vmem:[%s636 + $0x1c] sm:$0xf]
        %v1574 = vld [vmem:[%s636 + $0x20] sm:$0xf]
        %v1575 = vld [vmem:[%s636 + $0x24] sm:$0xf]
        %v1576 = vld [vmem:[%s636 + $0x28] sm:$0xf]
        %v1577 = vld [vmem:[%s636 + $0x2c] sm:$0xf]
        %v1578 = vld [vmem:[%s636 + $0x30] sm:$0xf]
        %v1579 = vld [vmem:[%s636 + $0x34] sm:$0xf]
        %v1580 = vld [vmem:[%s636 + $0x38] sm:$0xf]
        %v1581 = vld [vmem:[%s636 + $0x3c] sm:$0xf]
        %v1598 = vunpack.c.l.b16 %v1566
        %v1599 = vunpack.c.l.b16 %v1567
        %v1600 = vunpack.c.l.b16 %v1568
        %v1601 = vunpack.c.l.b16 %v1569
        %v1602 = vunpack.c.l.b16 %v1570
        %v1603 = vunpack.c.l.b16 %v1571
        %v1604 = vunpack.c.l.b16 %v1572
        %v1605 = vunpack.c.l.b16 %v1573
        %v1606 = vunpack.c.l.b16 %v1574
        %v1607 = vunpack.c.l.b16 %v1575
        %v1608 = vunpack.c.l.b16 %v1576
        %v1609 = vunpack.c.l.b16 %v1577
        %v1610 = vunpack.c.l.b16 %v1578
        %v1611 = vunpack.c.l.b16 %v1579
        %v1612 = vunpack.c.l.b16 %v1580
        %v1613 = vunpack.c.l.b16 %v1581
        %v1614 = vpack.c.b16 %v1599, %v1598
        %v1615 = vpack.c.b16 %v1601, %v1600
        %v1616 = vpack.c.b16 %v1603, %v1602
        %v1617 = vpack.c.b16 %v1605, %v1604
        %v1618 = vpack.c.b16 %v1607, %v1606
        %v1619 = vpack.c.b16 %v1609, %v1608
        %v1620 = vpack.c.b16 %v1611, %v1610
        %v1621 = vpack.c.b16 %v1613, %v1612
        %1630 = vmatpush.bf16.msra.mxu0 %v1621
        %1631 = vmatpush.bf16.msra.mxu0 %v1620
        %1632 = vmatpush.bf16.msra.mxu0 %v1619
        %1633 = vmatpush.bf16.msra.mxu0 %v1618
        %1634 = vmatpush.bf16.msra.mxu0 %v1617
        %1635 = vmatpush.bf16.msra.mxu0 %v1616
        %1636 = vmatpush.bf16.msra.mxu0 %v1615
        %1637 = vmatpush.bf16.msra.mxu0 %v1614
        %1638 = vmatmul.bf16.gmra.mxu0 %v1565
        %v1639 = vpop.f32.mrf.mxu0
        %v1640 = vadd.f32 0.0, %v1639
        %v1641 = vpop.f32.mrf.mxu0
        %1642 = vdwg.mxu0
        %v1643 = vadd.f32 %v1507, %v1640
        %1644 = vst.msk [vmem:[%s591] sm:$0xff] %vm649, %v1643
        %s1645 = sand.u32 %s385, 1
        %s1646 = scalar_lea.sflag [#allocation3], %s1645
        %s1647 = sand.u32 %s385, 1
        %s1648 = smul.addr %s1647, 8
        %s1649 = scalar_lea.vmem [#allocation2], %s1648
        // Predicated region
        $region77: #{tpu_custom_call.1} parent=71 // pred_check
          %p1650 = pneg %p395
        $region78: #{tpu_custom_call.1} parent=71 // pred_check_branch
          %1652 = sbr.rel (%p1650) target = $region80
        $region79: #{tpu_custom_call.1} parent=71 // pred_region
          %1654 = vsyncadd %s1646, 0
          %s1655 = smul.addr %s31, 8
          %s1656 = scalar_lea.hbm %s13, %s1655
          %s1658 = sshll.u32 %s1649, 4
          %s1659 = int_to_ptr.vmem [resolvable:$true] %s1658
          %s1660 = sshll.u32 %s1656, 4
          %s1661 = int_to_ptr.hbm [resolvable:$true] %s1660
          %1663 = dma.vmem_to_hbm [thread:$0]  %s1659, 128, %s1661, %s1646
        $region80: #{tpu_custom_call.1} parent=71 // pred_fallthru
          _
      $region72: #{tpu_custom_call.1} parent=5 // pred_fallthru
        _
      %p1664 = scmp.le.s32.totalorder 2, %s22
      // Predicated region
      $region81: #{tpu_custom_call.1} parent=5 // pred_check
        %p1665 = pneg %p1664
      $region82: #{tpu_custom_call.1} parent=5 // pred_check_branch
        %1667 = sbr.rel (%p1665) target = $region84
      $region83: #{tpu_custom_call.1} parent=5 // pred_region
        %s1668 = ssub.s32 %s22, 2
        // Predicated region
        $region85: #{tpu_custom_call.1} parent=83 // pred_check
          %p1669 = pneg %p401
        $region86: #{tpu_custom_call.1} parent=83 // pred_check_branch
          %1671 = sbr.rel (%p1669) target = $region88
        $region87: #{tpu_custom_call.1} parent=83 // pred_region
          %s1672 = sand.u32 %s386, 1
          %s1673 = scalar_lea.sflag [#allocation3], %s1672
          %s1674 = sand.u32 %s386, 1
          %s1675 = smul.addr %s1674, 8
          %s1676 = scalar_lea.vmem [#allocation2], %s1675
          %1678 = dma.done %s1673, 128
        $region88: #{tpu_custom_call.1} parent=83 // pred_fallthru
          _
      $region84: #{tpu_custom_call.1} parent=5 // pred_fallthru
        _
    $region6: #{tpu_custom_call.1} parent=1 // loop_footer
      %s26 = sadd.s32 1, %s22
    $region7: #{tpu_custom_call.1} parent=1 // loop_footer_branch
      %21 = sbr.rel target = $region3
    $region8: #{tpu_custom_call.1} parent=1 // loop_exit
      _
    %1679 = vsyncpa [#allocation3], 1
    %s1680 = scalar_lea.sflag [#allocation3], 1
    %1681 = vsyncpa %s1680, 1

</llo_original>
